<compile_context>
chip_gen: v5e
topology: v5e:2x2
jax: 0.10.0
libtpu: 0.0.40
codegen_flags: <defaults>
</compile_context>

<pallas_src>
import functools

import jax
import jax.numpy as jnp
from jax.experimental import pallas as pl
from jax.experimental.pallas import tpu as pltpu


# ----------------------------------------------------------------------------
# Pallas kernel: the whole Transformer; grid iterates over depth (layers).
# ----------------------------------------------------------------------------
def transformer_stack_kernel(x_ref, bias_ref,
                             wqkv_ref, wu_ref, bu_ref,
                             g1_ref, beta1_ref,
                             w1_ref, b1_ref, w2_ref, b2_ref,
                             g2_ref, beta2_ref,
                             out_ref, act_ref, *, batch, t, k, heads):
    layer = pl.program_id(0)
    m = batch * t
    hk = heads * k
    cdt = wqkv_ref.dtype                      # MXU operand dtype (f32 or bf16)

    @pl.when(layer == 0)
    def _():
        act_ref[...] = x_ref[...]             # seed carried activation (m, k)

    x = act_ref[...]                          # (m, k) f32, resident in VMEM

    # ---- fused Q/K/V projection: one (m,k)@(k,3*h*k) MXU matmul -------------
    proj = jnp.dot(x.astype(cdt), wqkv_ref[0],
                   preferred_element_type=jnp.float32)        # (m, 3*h*k)
    q = proj[:, :hk]                 # 1/sqrt(k) already folded into Wq columns
    kk = proj[:, hk:2 * hk]
    v = proj[:, 2 * hk:]

    neg_bias = bias_ref[...]         # (m, m): 0 within batch, -1e30 across

    wu = wu_ref[0]                   # (h*k, k)
    attn = jnp.zeros((m, k), jnp.float32)
    for h in range(heads):           # static unroll over tiny head dim
        sl = slice(h * k, (h + 1) * k)
        qh = q[:, sl].astype(cdt)
        kh = kk[:, sl].astype(cdt)
        vh = v[:, sl].astype(cdt)
        # contract on the last dims: MXU handles the transpose, no kh.T value
        s = jax.lax.dot_general(qh, kh, (((1,), (1,)), ((), ())),
                                preferred_element_type=jnp.float32)   # (m, m)
        s = s + neg_bias
        s = s - jnp.max(s, axis=-1, keepdims=True)
        e = jnp.exp(s)
        inv = pl.reciprocal(jnp.sum(e, axis=-1, keepdims=True), approx=True)
        p = e * inv
        oh = jnp.dot(p.astype(cdt), vh,
                     preferred_element_type=jnp.float32)              # (m, k)
        # fold "unify heads" into the loop: attn = sum_h o_h @ Wu[h-block]
        attn = attn + jnp.dot(oh.astype(cdt), wu[sl, :],
                              preferred_element_type=jnp.float32)
    attn = attn + bu_ref[0]

    # ---- residual + LayerNorm 1 (f32 statistics) ----------------------------
    y = attn + x
    mu = jnp.mean(y, axis=-1, keepdims=True)
    var = jnp.mean((y - mu) ** 2, axis=-1, keepdims=True)
    y = (y - mu) * jax.lax.rsqrt(var + 1e-5) * g1_ref[0] + beta1_ref[0]

    # ---- MLP (k -> 4k -> k) with ReLU, M = batch*t --------------------------
    h1 = jnp.dot(y.astype(cdt), w1_ref[0],
                 preferred_element_type=jnp.float32) + b1_ref[0]
    h1 = jnp.maximum(h1, 0.0)
    h2 = jnp.dot(h1.astype(cdt), w2_ref[0],
                 preferred_element_type=jnp.float32) + b2_ref[0]

    # ---- residual + LayerNorm 2 ---------------------------------------------
    z = h2 + y
    mu2 = jnp.mean(z, axis=-1, keepdims=True)
    var2 = jnp.mean((z - mu2) ** 2, axis=-1, keepdims=True)
    z = (z - mu2) * jax.lax.rsqrt(var2 + 1e-5) * g2_ref[0] + beta2_ref[0]

    act_ref[...] = z                          # carry to next layer (VMEM only)

    @pl.when(layer == pl.num_programs(0) - 1)
    def _():
        # Single 2 KiB store; at production shapes pad K to a multiple of 128
        # (or emit a (batch, t*k) lane-dense block) for unmasked vst.
        out_ref[...] = z.reshape(batch, t, k)


# ----------------------------------------------------------------------------
# Wrapper
# ----------------------------------------------------------------------------
def transformer_pallas(x, stacked, *, heads, k):
    (wqkv, wu, bu, g1, beta1, w1, b1, w2, b2, g2, beta2) = stacked
    depth = wqkv.shape[0]
    b, t, feat = x.shape
    assert feat == k
    m = b * t

    x2 = x.reshape(m, k).astype(jnp.float32)
    # Block-diagonal additive attention bias (host-built, hoisted, tiny).
    row_batch = jnp.arange(m, dtype=jnp.int32) // t
    attn_bias = jnp.where(row_batch[:, None] == row_batch[None, :],
                          0.0, -1e30).astype(jnp.float32)

    kernel = functools.partial(transformer_stack_kernel,
                               batch=b, t=t, k=k, heads=heads)

    def layer_spec(arr):
        nd = arr.ndim
        return pl.BlockSpec((1,) + tuple(arr.shape[1:]),
                            lambda l, _n=nd: (l,) + (0,) * (_n - 1))

    in_specs = [pl.BlockSpec((m, k), lambda l: (0, 0)),    # x: loaded once
                pl.BlockSpec((m, m), lambda l: (0, 0))]    # bias: loaded once
    for arr in stacked:
        in_specs.append(layer_spec(arr))                   # per-layer weights

    return pl.pallas_call(
        kernel,
        out_shape=jax.ShapeDtypeStruct((b, t, k), jnp.float32),
        grid_spec=pltpu.PrefetchScalarGridSpec(
            num_scalar_prefetch=0,
            grid=(depth,),
            in_specs=in_specs,
            out_specs=pl.BlockSpec((b, t, k), lambda l: (0, 0, 0)),
            scratch_shapes=[pltpu.VMEM((m, k), jnp.float32)],
        ),
        compiler_params=pltpu.CompilerParams(
            # sequential over layers: activation carried in VMEM scratch
            dimension_semantics=("arbitrary",),
            vmem_limit_bytes=32 * 1024 * 1024,
        ),
    )(x2, attn_bias, wqkv, wu, bu, g1, beta1, w1, b1, w2, b2, g2, beta2)


# ----------------------------------------------------------------------------
# Parameter construction (deterministic, synthetic) + host-side fusing/stacking
# ----------------------------------------------------------------------------
def init_block_params(key, k, heads):
    keys = jax.random.split(key, 6)
    s = 0.05
    wq = jax.random.normal(keys[0], (k, k * heads), jnp.float32) * s
    wk = jax.random.normal(keys[1], (k, k * heads), jnp.float32) * s
    wv = jax.random.normal(keys[2], (k, k * heads), jnp.float32) * s
    wu = jax.random.normal(keys[3], (k * heads, k), jnp.float32) * s
    bu = jnp.zeros((1, k), jnp.float32)
    g1 = jnp.ones((1, k), jnp.float32)
    beta1 = jnp.zeros((1, k), jnp.float32)
    w1 = jax.random.normal(keys[4], (k, 4 * k), jnp.float32) * s
    b1 = jnp.zeros((1, 4 * k), jnp.float32)
    w2 = jax.random.normal(keys[5], (4 * k, k), jnp.float32) * s
    b2 = jnp.zeros((1, k), jnp.float32)
    g2 = jnp.ones((1, k), jnp.float32)
    beta2 = jnp.zeros((1, k), jnp.float32)
    return (wq, wk, wv, wu, bu, g1, beta1, w1, b1, w2, b2, g2, beta2)


def stack_params(all_params, k, heads, mxu_dtype=jnp.float32):
    """Fuse Q|K|V (with 1/sqrt(k) folded into Wq) and stack over depth."""
    qk_scale = 1.0 / (float(k) ** 0.5)
    fused = []
    for (wq, wk, wv, wu, bu, g1, beta1, w1, b1, w2, b2, g2, beta2) in all_params:
        wqkv = jnp.concatenate([wq * qk_scale, wk, wv], axis=1)  # (k, 3*h*k)
        fused.append((wqkv, wu, bu, g1, beta1, w1, b1, w2, b2, g2, beta2))
    mxu_idx = {0, 1, 5, 7}   # wqkv, wu, w1, w2 -> MXU operand dtype
    stacked = []
    for i in range(11):
        arr = jnp.stack([f[i] for f in fused])
        stacked.append(arr.astype(mxu_dtype if i in mxu_idx else jnp.float32))
    return tuple(stacked)


# ----------------------------------------------------------------------------
# Pure-JAX reference (mirrors the PyTorch forward) for validation
# ----------------------------------------------------------------------------
def block_ref(x, params, heads, k):
    (wq, wk, wv, wu, bu, g1, beta1, w1, b1, w2, b2, g2, beta2) = params
    b, t, _ = x.shape
    q = (x @ wq).reshape(b, t, heads, k)
    kk = (x @ wk).reshape(b, t, heads, k)
    v = (x @ wv).reshape(b, t, heads, k)
    scale = 1.0 / (float(k) ** 0.25)
    q = jnp.transpose(q, (0, 2, 1, 3)) * scale
    kk = jnp.transpose(kk, (0, 2, 1, 3)) * scale
    v = jnp.transpose(v, (0, 2, 1, 3))
    dot = jnp.einsum('bhtk,bhsk->bhts', q, kk)
    dot = jax.nn.softmax(dot, axis=-1)
    out = jnp.einsum('bhts,bhsk->bhtk', dot, v)
    out = jnp.transpose(out, (0, 2, 1, 3)).reshape(b, t, heads * k)
    attn = out @ wu + bu[0]

    def ln(y, g, beta):
        mu = jnp.mean(y, axis=-1, keepdims=True)
        var = jnp.mean((y - mu) ** 2, axis=-1, keepdims=True)
        return (y - mu) * jax.lax.rsqrt(var + 1e-5) * g[0] + beta[0]

    y = ln(attn + x, g1, beta1)
    h = jnp.maximum(y @ w1 + b1[0], 0.0)
    h = h @ w2 + b2[0]
    return ln(h + y, g2, beta2)


def transformer_ref(x, all_params, heads, k):
    for params in all_params:
        x = block_ref(x, params, heads, k)
    return x


if __name__ == "__main__":
    # Small shapes consistent with the module's forward: x is (b, t, k)
    K, DEPTH, HEADS, MLP_DIM = 32, 2, 8, 128   # mlp_dim unused by the module
    B, T = 2, 8

    root = jax.random.PRNGKey(0)
    x_key, *blk_keys = jax.random.split(root, DEPTH + 1)
    x = jax.random.normal(x_key, (B, T, K), jnp.float32)
    all_params = [init_block_params(bk, K, HEADS) for bk in blk_keys]

    ref = transformer_ref(x, all_params, HEADS, K)

    # 1) f32 MXU operands -- strict numerical check of the kernel logic
    out_f32 = transformer_pallas(
        x, stack_params(all_params, K, HEADS, jnp.float32), heads=HEADS, k=K)
    out_f32 = jax.block_until_ready(out_f32)
    assert out_f32.shape == (B, T, K)
    assert jnp.allclose(out_f32, ref, atol=5e-3, rtol=5e-3), \
        "f32 mismatch vs reference"

    # 2) bf16 MXU operands (v6e/v7x throughput; softmax/LN stats stay f32,
    #    so this path is also safe on v5e whose VPU/EUP lack bf16)
    out_bf16 = transformer_pallas(
        x, stack_params(all_params, K, HEADS, jnp.bfloat16), heads=HEADS, k=K)
    out_bf16 = jax.block_until_ready(out_bf16)
    assert jnp.allclose(out_bf16, ref, atol=5e-2, rtol=5e-2), \
        "bf16 mismatch vs reference"

    print("KERNEL_OK")
</pallas_src>

<mosaic_0001>
module attributes {stable_mosaic.version = 11 : i64} {
  func.func @transformer_stack_kernel(%arg0: i32, %arg1: memref<16x32xf32, #tpu.memory_space<vmem>>, %arg2: memref<16x16xf32, #tpu.memory_space<vmem>>, %arg3: memref<1x32x768xf32, #tpu.memory_space<vmem>>, %arg4: memref<1x256x32xf32, #tpu.memory_space<vmem>>, %arg5: memref<1x1x32xf32, #tpu.memory_space<vmem>>, %arg6: memref<1x1x32xf32, #tpu.memory_space<vmem>>, %arg7: memref<1x1x32xf32, #tpu.memory_space<vmem>>, %arg8: memref<1x32x128xf32, #tpu.memory_space<vmem>>, %arg9: memref<1x1x128xf32, #tpu.memory_space<vmem>>, %arg10: memref<1x128x32xf32, #tpu.memory_space<vmem>>, %arg11: memref<1x1x32xf32, #tpu.memory_space<vmem>>, %arg12: memref<1x1x32xf32, #tpu.memory_space<vmem>>, %arg13: memref<1x1x32xf32, #tpu.memory_space<vmem>>, %arg14: memref<2x8x32xf32, #tpu.memory_space<vmem>>, %arg15: memref<16x32xf32, #tpu.memory_space<vmem>>) attributes {dimension_semantics = [#tpu.dimension_semantics<arbitrary>], iteration_bounds = array<i64: 2>, scalar_prefetch = 0 : i64, scratch_operands = 1 : i64, tpu.core_type = #tpu.core_type<tc>, window_params = [{pipeline_mode = #tpu.pipeline_mode<synchronous>, transform_indices = @transform_0, window_bounds = array<i64: 16, 32>}, {pipeline_mode = #tpu.pipeline_mode<synchronous>, transform_indices = @transform_1, window_bounds = array<i64: 16, 16>}, {transform_indices = @transform_2, window_bounds = array<i64: 1, 32, 768>}, {transform_indices = @transform_3, window_bounds = array<i64: 1, 256, 32>}, {transform_indices = @transform_4, window_bounds = array<i64: 1, 1, 32>}, {transform_indices = @transform_5, window_bounds = array<i64: 1, 1, 32>}, {transform_indices = @transform_6, window_bounds = array<i64: 1, 1, 32>}, {transform_indices = @transform_7, window_bounds = array<i64: 1, 32, 128>}, {transform_indices = @transform_8, window_bounds = array<i64: 1, 1, 128>}, {transform_indices = @transform_9, window_bounds = array<i64: 1, 128, 32>}, {transform_indices = @transform_10, window_bounds = array<i64: 1, 1, 32>}, {transform_indices = @transform_11, window_bounds = array<i64: 1, 1, 32>}, {transform_indices = @transform_12, window_bounds = array<i64: 1, 1, 32>}, {pipeline_mode = #tpu.pipeline_mode<synchronous>, transform_indices = @transform_13, window_bounds = array<i64: 2, 8, 32>}]} {
    %c0_i32 = arith.constant 0 : i32
    %0 = arith.cmpi eq, %arg0, %c0_i32 : i32
    %1 = arith.extui %0 : i1 to i32
    %c0_i32_0 = arith.constant 0 : i32
    %2 = arith.cmpi ne, %1, %c0_i32_0 : i32
    scf.if %2 {
      %c0_94 = arith.constant 0 : index
      %c0_95 = arith.constant 0 : index
      %244 = vector.load %arg1[%c0_94, %c0_95] : memref<16x32xf32, #tpu.memory_space<vmem>>, vector<16x32xf32>
      %c0_96 = arith.constant 0 : index
      %c0_97 = arith.constant 0 : index
      %245 = vector.load %arg15[%c0_96, %c0_97] : memref<16x32xf32, #tpu.memory_space<vmem>>, vector<16x32xf32>
      tpu.vector_store %arg15[%c0_96, %c0_97], %244 {strides = array<i32>} : memref<16x32xf32, #tpu.memory_space<vmem>>, vector<16x32xf32>,
    } else {
    }
    %c0 = arith.constant 0 : index
    %c0_1 = arith.constant 0 : index
    %3 = vector.load %arg15[%c0, %c0_1] : memref<16x32xf32, #tpu.memory_space<vmem>>, vector<16x32xf32>
    %c0_2 = arith.constant 0 : index
    %c0_3 = arith.constant 0 : index
    %c0_4 = arith.constant 0 : index
    %4 = vector.load %arg3[%c0_2, %c0_3, %c0_4] : memref<1x32x768xf32, #tpu.memory_space<vmem>>, vector<1x32x768xf32>
    %5 = vector.shape_cast %4 : vector<1x32x768xf32> to vector<32x768xf32>
    %cst = arith.constant dense<0.000000e+00> : vector<16x768xf32>
    %6 = tpu.matmul %3, %5, %cst {dimension_numbers = #tpu.dot_dimension_numbers<[1], [0], [0], [1], [0, 0, 1, 1], [], []>} : vector<16x32xf32>, vector<32x768xf32>, vector<16x768xf32> -> vector<16x768xf32>
    %7 = vector.extract_strided_slice %6 {offsets = [0, 0], sizes = [16, 256], strides = [1, 1]} : vector<16x768xf32> to vector<16x256xf32>
    %8 = vector.extract_strided_slice %6 {offsets = [0, 256], sizes = [16, 256], strides = [1, 1]} : vector<16x768xf32> to vector<16x256xf32>
    %9 = vector.extract_strided_slice %6 {offsets = [0, 512], sizes = [16, 256], strides = [1, 1]} : vector<16x768xf32> to vector<16x256xf32>
    %c0_5 = arith.constant 0 : index
    %c0_6 = arith.constant 0 : index
    %10 = vector.load %arg2[%c0_5, %c0_6] : memref<16x16xf32, #tpu.memory_space<vmem>>, vector<16x16xf32>
    %c0_7 = arith.constant 0 : index
    %c0_8 = arith.constant 0 : index
    %c0_9 = arith.constant 0 : index
    %11 = vector.load %arg4[%c0_7, %c0_8, %c0_9] : memref<1x256x32xf32, #tpu.memory_space<vmem>>, vector<1x256x32xf32>
    %12 = vector.shape_cast %11 : vector<1x256x32xf32> to vector<256x32xf32>
    %cst_10 = arith.constant 0.000000e+00 : f32
    %13 = vector.broadcast %cst_10 : f32 to vector<16x32xf32>
    %14 = vector.extract_strided_slice %7 {offsets = [0, 0], sizes = [16, 32], strides = [1, 1]} : vector<16x256xf32> to vector<16x32xf32>
    %15 = vector.extract_strided_slice %8 {offsets = [0, 0], sizes = [16, 32], strides = [1, 1]} : vector<16x256xf32> to vector<16x32xf32>
    %16 = vector.extract_strided_slice %9 {offsets = [0, 0], sizes = [16, 32], strides = [1, 1]} : vector<16x256xf32> to vector<16x32xf32>
    %cst_11 = arith.constant dense<0.000000e+00> : vector<16x16xf32>
    %17 = tpu.matmul %14, %15, %cst_11 {dimension_numbers = #tpu.dot_dimension_numbers<[1], [1], [0], [0], [0, 0, 1, 0], [], []>} : vector<16x32xf32>, vector<16x32xf32>, vector<16x16xf32> -> vector<16x16xf32>
    %18 = arith.addf %17, %10 : vector<16x16xf32>
    %cst_12 = arith.constant dense<0xFF800000> : vector<16xf32>
    %19 = vector.multi_reduction <maximumf>, %18, %cst_12 [1] : vector<16x16xf32> to vector<16xf32>
    %20 = vector.shape_cast %19 : vector<16xf32> to vector<16x1xf32>
    %21 = vector.broadcast %20 : vector<16x1xf32> to vector<16x16xf32>
    %22 = arith.subf %18, %21 : vector<16x16xf32>
    %23 = math.exp %22 : vector<16x16xf32>
    %cst_13 = arith.constant dense<0.000000e+00> : vector<16xf32>
    %24 = vector.multi_reduction <add>, %23, %cst_13 [1] : vector<16x16xf32> to vector<16xf32>
    %25 = vector.shape_cast %24 : vector<16xf32> to vector<16x1xf32>
    %26 = tpu.reciprocal %25 {approx = true} : vector<16x1xf32> -> vector<16x1xf32>
    %27 = vector.broadcast %26 : vector<16x1xf32> to vector<16x16xf32>
    %28 = arith.mulf %23, %27 : vector<16x16xf32>
    %cst_14 = arith.constant dense<0.000000e+00> : vector<16x32xf32>
    %29 = tpu.matmul %28, %16, %cst_14 {dimension_numbers = #tpu.dot_dimension_numbers<[1], [0], [0], [1], [0, 0, 1, 1], [], []>} : vector<16x16xf32>, vector<16x32xf32>, vector<16x32xf32> -> vector<16x32xf32>
    %30 = vector.extract_strided_slice %12 {offsets = [0, 0], sizes = [32, 32], strides = [1, 1]} : vector<256x32xf32> to vector<32x32xf32>
    %cst_15 = arith.constant dense<0.000000e+00> : vector<16x32xf32>
    %31 = tpu.matmul %29, %30, %cst_15 {dimension_numbers = #tpu.dot_dimension_numbers<[1], [0], [0], [1], [0, 0, 1, 1], [], []>} : vector<16x32xf32>, vector<32x32xf32>, vector<16x32xf32> -> vector<16x32xf32>
    %32 = arith.addf %13, %31 : vector<16x32xf32>
    %33 = vector.extract_strided_slice %7 {offsets = [0, 32], sizes = [16, 32], strides = [1, 1]} : vector<16x256xf32> to vector<16x32xf32>
    %34 = vector.extract_strided_slice %8 {offsets = [0, 32], sizes = [16, 32], strides = [1, 1]} : vector<16x256xf32> to vector<16x32xf32>
    %35 = vector.extract_strided_slice %9 {offsets = [0, 32], sizes = [16, 32], strides = [1, 1]} : vector<16x256xf32> to vector<16x32xf32>
    %cst_16 = arith.constant dense<0.000000e+00> : vector<16x16xf32>
    %36 = tpu.matmul %33, %34, %cst_16 {dimension_numbers = #tpu.dot_dimension_numbers<[1], [1], [0], [0], [0, 0, 1, 0], [], []>} : vector<16x32xf32>, vector<16x32xf32>, vector<16x16xf32> -> vector<16x16xf32>
    %37 = arith.addf %36, %10 : vector<16x16xf32>
    %cst_17 = arith.constant dense<0xFF800000> : vector<16xf32>
    %38 = vector.multi_reduction <maximumf>, %37, %cst_17 [1] : vector<16x16xf32> to vector<16xf32>
    %39 = vector.shape_cast %38 : vector<16xf32> to vector<16x1xf32>
    %40 = vector.broadcast %39 : vector<16x1xf32> to vector<16x16xf32>
    %41 = arith.subf %37, %40 : vector<16x16xf32>
    %42 = math.exp %41 : vector<16x16xf32>
    %cst_18 = arith.constant dense<0.000000e+00> : vector<16xf32>
    %43 = vector.multi_reduction <add>, %42, %cst_18 [1] : vector<16x16xf32> to vector<16xf32>
    %44 = vector.shape_cast %43 : vector<16xf32> to vector<16x1xf32>
    %45 = tpu.reciprocal %44 {approx = true} : vector<16x1xf32> -> vector<16x1xf32>
    %46 = vector.broadcast %45 : vector<16x1xf32> to vector<16x16xf32>
    %47 = arith.mulf %42, %46 : vector<16x16xf32>
    %cst_19 = arith.constant dense<0.000000e+00> : vector<16x32xf32>
    %48 = tpu.matmul %47, %35, %cst_19 {dimension_numbers = #tpu.dot_dimension_numbers<[1], [0], [0], [1], [0, 0, 1, 1], [], []>} : vector<16x16xf32>, vector<16x32xf32>, vector<16x32xf32> -> vector<16x32xf32>
    %49 = vector.extract_strided_slice %12 {offsets = [32, 0], sizes = [32, 32], strides = [1, 1]} : vector<256x32xf32> to vector<32x32xf32>
    %cst_20 = arith.constant dense<0.000000e+00> : vector<16x32xf32>
    %50 = tpu.matmul %48, %49, %cst_20 {dimension_numbers = #tpu.dot_dimension_numbers<[1], [0], [0], [1], [0, 0, 1, 1], [], []>} : vector<16x32xf32>, vector<32x32xf32>, vector<16x32xf32> -> vector<16x32xf32>
    %51 = arith.addf %32, %50 : vector<16x32xf32>
    %52 = vector.extract_strided_slice %7 {offsets = [0, 64], sizes = [16, 32], strides = [1, 1]} : vector<16x256xf32> to vector<16x32xf32>
    %53 = vector.extract_strided_slice %8 {offsets = [0, 64], sizes = [16, 32], strides = [1, 1]} : vector<16x256xf32> to vector<16x32xf32>
    %54 = vector.extract_strided_slice %9 {offsets = [0, 64], sizes = [16, 32], strides = [1, 1]} : vector<16x256xf32> to vector<16x32xf32>
    %cst_21 = arith.constant dense<0.000000e+00> : vector<16x16xf32>
    %55 = tpu.matmul %52, %53, %cst_21 {dimension_numbers = #tpu.dot_dimension_numbers<[1], [1], [0], [0], [0, 0, 1, 0], [], []>} : vector<16x32xf32>, vector<16x32xf32>, vector<16x16xf32> -> vector<16x16xf32>
    %56 = arith.addf %55, %10 : vector<16x16xf32>
    %cst_22 = arith.constant dense<0xFF800000> : vector<16xf32>
    %57 = vector.multi_reduction <maximumf>, %56, %cst_22 [1] : vector<16x16xf32> to vector<16xf32>
    %58 = vector.shape_cast %57 : vector<16xf32> to vector<16x1xf32>
    %59 = vector.broadcast %58 : vector<16x1xf32> to vector<16x16xf32>
    %60 = arith.subf %56, %59 : vector<16x16xf32>
    %61 = math.exp %60 : vector<16x16xf32>
    %cst_23 = arith.constant dense<0.000000e+00> : vector<16xf32>
    %62 = vector.multi_reduction <add>, %61, %cst_23 [1] : vector<16x16xf32> to vector<16xf32>
    %63 = vector.shape_cast %62 : vector<16xf32> to vector<16x1xf32>
    %64 = tpu.reciprocal %63 {approx = true} : vector<16x1xf32> -> vector<16x1xf32>
    %65 = vector.broadcast %64 : vector<16x1xf32> to vector<16x16xf32>
    %66 = arith.mulf %61, %65 : vector<16x16xf32>
    %cst_24 = arith.constant dense<0.000000e+00> : vector<16x32xf32>
    %67 = tpu.matmul %66, %54, %cst_24 {dimension_numbers = #tpu.dot_dimension_numbers<[1], [0], [0], [1], [0, 0, 1, 1], [], []>} : vector<16x16xf32>, vector<16x32xf32>, vector<16x32xf32> -> vector<16x32xf32>
    %68 = vector.extract_strided_slice %12 {offsets = [64, 0], sizes = [32, 32], strides = [1, 1]} : vector<256x32xf32> to vector<32x32xf32>
    %cst_25 = arith.constant dense<0.000000e+00> : vector<16x32xf32>
    %69 = tpu.matmul %67, %68, %cst_25 {dimension_numbers = #tpu.dot_dimension_numbers<[1], [0], [0], [1], [0, 0, 1, 1], [], []>} : vector<16x32xf32>, vector<32x32xf32>, vector<16x32xf32> -> vector<16x32xf32>
    %70 = arith.addf %51, %69 : vector<16x32xf32>
    %71 = vector.extract_strided_slice %7 {offsets = [0, 96], sizes = [16, 32], strides = [1, 1]} : vector<16x256xf32> to vector<16x32xf32>
    %72 = vector.extract_strided_slice %8 {offsets = [0, 96], sizes = [16, 32], strides = [1, 1]} : vector<16x256xf32> to vector<16x32xf32>
    %73 = vector.extract_strided_slice %9 {offsets = [0, 96], sizes = [16, 32], strides = [1, 1]} : vector<16x256xf32> to vector<16x32xf32>
    %cst_26 = arith.constant dense<0.000000e+00> : vector<16x16xf32>
    %74 = tpu.matmul %71, %72, %cst_26 {dimension_numbers = #tpu.dot_dimension_numbers<[1], [1], [0], [0], [0, 0, 1, 0], [], []>} : vector<16x32xf32>, vector<16x32xf32>, vector<16x16xf32> -> vector<16x16xf32>
    %75 = arith.addf %74, %10 : vector<16x16xf32>
    %cst_27 = arith.constant dense<0xFF800000> : vector<16xf32>
    %76 = vector.multi_reduction <maximumf>, %75, %cst_27 [1] : vector<16x16xf32> to vector<16xf32>
    %77 = vector.shape_cast %76 : vector<16xf32> to vector<16x1xf32>
    %78 = vector.broadcast %77 : vector<16x1xf32> to vector<16x16xf32>
    %79 = arith.subf %75, %78 : vector<16x16xf32>
    %80 = math.exp %79 : vector<16x16xf32>
    %cst_28 = arith.constant dense<0.000000e+00> : vector<16xf32>
    %81 = vector.multi_reduction <add>, %80, %cst_28 [1] : vector<16x16xf32> to vector<16xf32>
    %82 = vector.shape_cast %81 : vector<16xf32> to vector<16x1xf32>
    %83 = tpu.reciprocal %82 {approx = true} : vector<16x1xf32> -> vector<16x1xf32>
    %84 = vector.broadcast %83 : vector<16x1xf32> to vector<16x16xf32>
    %85 = arith.mulf %80, %84 : vector<16x16xf32>
    %cst_29 = arith.constant dense<0.000000e+00> : vector<16x32xf32>
    %86 = tpu.matmul %85, %73, %cst_29 {dimension_numbers = #tpu.dot_dimension_numbers<[1], [0], [0], [1], [0, 0, 1, 1], [], []>} : vector<16x16xf32>, vector<16x32xf32>, vector<16x32xf32> -> vector<16x32xf32>
    %87 = vector.extract_strided_slice %12 {offsets = [96, 0], sizes = [32, 32], strides = [1, 1]} : vector<256x32xf32> to vector<32x32xf32>
    %cst_30 = arith.constant dense<0.000000e+00> : vector<16x32xf32>
    %88 = tpu.matmul %86, %87, %cst_30 {dimension_numbers = #tpu.dot_dimension_numbers<[1], [0], [0], [1], [0, 0, 1, 1], [], []>} : vector<16x32xf32>, vector<32x32xf32>, vector<16x32xf32> -> vector<16x32xf32>
    %89 = arith.addf %70, %88 : vector<16x32xf32>
    %90 = vector.extract_strided_slice %7 {offsets = [0, 128], sizes = [16, 32], strides = [1, 1]} : vector<16x256xf32> to vector<16x32xf32>
    %91 = vector.extract_strided_slice %8 {offsets = [0, 128], sizes = [16, 32], strides = [1, 1]} : vector<16x256xf32> to vector<16x32xf32>
    %92 = vector.extract_strided_slice %9 {offsets = [0, 128], sizes = [16, 32], strides = [1, 1]} : vector<16x256xf32> to vector<16x32xf32>
    %cst_31 = arith.constant dense<0.000000e+00> : vector<16x16xf32>
    %93 = tpu.matmul %90, %91, %cst_31 {dimension_numbers = #tpu.dot_dimension_numbers<[1], [1], [0], [0], [0, 0, 1, 0], [], []>} : vector<16x32xf32>, vector<16x32xf32>, vector<16x16xf32> -> vector<16x16xf32>
    %94 = arith.addf %93, %10 : vector<16x16xf32>
    %cst_32 = arith.constant dense<0xFF800000> : vector<16xf32>
    %95 = vector.multi_reduction <maximumf>, %94, %cst_32 [1] : vector<16x16xf32> to vector<16xf32>
    %96 = vector.shape_cast %95 : vector<16xf32> to vector<16x1xf32>
    %97 = vector.broadcast %96 : vector<16x1xf32> to vector<16x16xf32>
    %98 = arith.subf %94, %97 : vector<16x16xf32>
    %99 = math.exp %98 : vector<16x16xf32>
    %cst_33 = arith.constant dense<0.000000e+00> : vector<16xf32>
    %100 = vector.multi_reduction <add>, %99, %cst_33 [1] : vector<16x16xf32> to vector<16xf32>
    %101 = vector.shape_cast %100 : vector<16xf32> to vector<16x1xf32>
    %102 = tpu.reciprocal %101 {approx = true} : vector<16x1xf32> -> vector<16x1xf32>
    %103 = vector.broadcast %102 : vector<16x1xf32> to vector<16x16xf32>
    %104 = arith.mulf %99, %103 : vector<16x16xf32>
    %cst_34 = arith.constant dense<0.000000e+00> : vector<16x32xf32>
    %105 = tpu.matmul %104, %92, %cst_34 {dimension_numbers = #tpu.dot_dimension_numbers<[1], [0], [0], [1], [0, 0, 1, 1], [], []>} : vector<16x16xf32>, vector<16x32xf32>, vector<16x32xf32> -> vector<16x32xf32>
    %106 = vector.extract_strided_slice %12 {offsets = [128, 0], sizes = [32, 32], strides = [1, 1]} : vector<256x32xf32> to vector<32x32xf32>
    %cst_35 = arith.constant dense<0.000000e+00> : vector<16x32xf32>
    %107 = tpu.matmul %105, %106, %cst_35 {dimension_numbers = #tpu.dot_dimension_numbers<[1], [0], [0], [1], [0, 0, 1, 1], [], []>} : vector<16x32xf32>, vector<32x32xf32>, vector<16x32xf32> -> vector<16x32xf32>
    %108 = arith.addf %89, %107 : vector<16x32xf32>
    %109 = vector.extract_strided_slice %7 {offsets = [0, 160], sizes = [16, 32], strides = [1, 1]} : vector<16x256xf32> to vector<16x32xf32>
    %110 = vector.extract_strided_slice %8 {offsets = [0, 160], sizes = [16, 32], strides = [1, 1]} : vector<16x256xf32> to vector<16x32xf32>
    %111 = vector.extract_strided_slice %9 {offsets = [0, 160], sizes = [16, 32], strides = [1, 1]} : vector<16x256xf32> to vector<16x32xf32>
    %cst_36 = arith.constant dense<0.000000e+00> : vector<16x16xf32>
    %112 = tpu.matmul %109, %110, %cst_36 {dimension_numbers = #tpu.dot_dimension_numbers<[1], [1], [0], [0], [0, 0, 1, 0], [], []>} : vector<16x32xf32>, vector<16x32xf32>, vector<16x16xf32> -> vector<16x16xf32>
    %113 = arith.addf %112, %10 : vector<16x16xf32>
    %cst_37 = arith.constant dense<0xFF800000> : vector<16xf32>
    %114 = vector.multi_reduction <maximumf>, %113, %cst_37 [1] : vector<16x16xf32> to vector<16xf32>
    %115 = vector.shape_cast %114 : vector<16xf32> to vector<16x1xf32>
    %116 = vector.broadcast %115 : vector<16x1xf32> to vector<16x16xf32>
    %117 = arith.subf %113, %116 : vector<16x16xf32>
    %118 = math.exp %117 : vector<16x16xf32>
    %cst_38 = arith.constant dense<0.000000e+00> : vector<16xf32>
    %119 = vector.multi_reduction <add>, %118, %cst_38 [1] : vector<16x16xf32> to vector<16xf32>
    %120 = vector.shape_cast %119 : vector<16xf32> to vector<16x1xf32>
    %121 = tpu.reciprocal %120 {approx = true} : vector<16x1xf32> -> vector<16x1xf32>
    %122 = vector.broadcast %121 : vector<16x1xf32> to vector<16x16xf32>
    %123 = arith.mulf %118, %122 : vector<16x16xf32>
    %cst_39 = arith.constant dense<0.000000e+00> : vector<16x32xf32>
    %124 = tpu.matmul %123, %111, %cst_39 {dimension_numbers = #tpu.dot_dimension_numbers<[1], [0], [0], [1], [0, 0, 1, 1], [], []>} : vector<16x16xf32>, vector<16x32xf32>, vector<16x32xf32> -> vector<16x32xf32>
    %125 = vector.extract_strided_slice %12 {offsets = [160, 0], sizes = [32, 32], strides = [1, 1]} : vector<256x32xf32> to vector<32x32xf32>
    %cst_40 = arith.constant dense<0.000000e+00> : vector<16x32xf32>
    %126 = tpu.matmul %124, %125, %cst_40 {dimension_numbers = #tpu.dot_dimension_numbers<[1], [0], [0], [1], [0, 0, 1, 1], [], []>} : vector<16x32xf32>, vector<32x32xf32>, vector<16x32xf32> -> vector<16x32xf32>
    %127 = arith.addf %108, %126 : vector<16x32xf32>
    %128 = vector.extract_strided_slice %7 {offsets = [0, 192], sizes = [16, 32], strides = [1, 1]} : vector<16x256xf32> to vector<16x32xf32>
    %129 = vector.extract_strided_slice %8 {offsets = [0, 192], sizes = [16, 32], strides = [1, 1]} : vector<16x256xf32> to vector<16x32xf32>
    %130 = vector.extract_strided_slice %9 {offsets = [0, 192], sizes = [16, 32], strides = [1, 1]} : vector<16x256xf32> to vector<16x32xf32>
    %cst_41 = arith.constant dense<0.000000e+00> : vector<16x16xf32>
    %131 = tpu.matmul %128, %129, %cst_41 {dimension_numbers = #tpu.dot_dimension_numbers<[1], [1], [0], [0], [0, 0, 1, 0], [], []>} : vector<16x32xf32>, vector<16x32xf32>, vector<16x16xf32> -> vector<16x16xf32>
    %132 = arith.addf %131, %10 : vector<16x16xf32>
    %cst_42 = arith.constant dense<0xFF800000> : vector<16xf32>
    %133 = vector.multi_reduction <maximumf>, %132, %cst_42 [1] : vector<16x16xf32> to vector<16xf32>
    %134 = vector.shape_cast %133 : vector<16xf32> to vector<16x1xf32>
    %135 = vector.broadcast %134 : vector<16x1xf32> to vector<16x16xf32>
    %136 = arith.subf %132, %135 : vector<16x16xf32>
    %137 = math.exp %136 : vector<16x16xf32>
    %cst_43 = arith.constant dense<0.000000e+00> : vector<16xf32>
    %138 = vector.multi_reduction <add>, %137, %cst_43 [1] : vector<16x16xf32> to vector<16xf32>
    %139 = vector.shape_cast %138 : vector<16xf32> to vector<16x1xf32>
    %140 = tpu.reciprocal %139 {approx = true} : vector<16x1xf32> -> vector<16x1xf32>
    %141 = vector.broadcast %140 : vector<16x1xf32> to vector<16x16xf32>
    %142 = arith.mulf %137, %141 : vector<16x16xf32>
    %cst_44 = arith.constant dense<0.000000e+00> : vector<16x32xf32>
    %143 = tpu.matmul %142, %130, %cst_44 {dimension_numbers = #tpu.dot_dimension_numbers<[1], [0], [0], [1], [0, 0, 1, 1], [], []>} : vector<16x16xf32>, vector<16x32xf32>, vector<16x32xf32> -> vector<16x32xf32>
    %144 = vector.extract_strided_slice %12 {offsets = [192, 0], sizes = [32, 32], strides = [1, 1]} : vector<256x32xf32> to vector<32x32xf32>
    %cst_45 = arith.constant dense<0.000000e+00> : vector<16x32xf32>
    %145 = tpu.matmul %143, %144, %cst_45 {dimension_numbers = #tpu.dot_dimension_numbers<[1], [0], [0], [1], [0, 0, 1, 1], [], []>} : vector<16x32xf32>, vector<32x32xf32>, vector<16x32xf32> -> vector<16x32xf32>
    %146 = arith.addf %127, %145 : vector<16x32xf32>
    %147 = vector.extract_strided_slice %7 {offsets = [0, 224], sizes = [16, 32], strides = [1, 1]} : vector<16x256xf32> to vector<16x32xf32>
    %148 = vector.extract_strided_slice %8 {offsets = [0, 224], sizes = [16, 32], strides = [1, 1]} : vector<16x256xf32> to vector<16x32xf32>
    %149 = vector.extract_strided_slice %9 {offsets = [0, 224], sizes = [16, 32], strides = [1, 1]} : vector<16x256xf32> to vector<16x32xf32>
    %cst_46 = arith.constant dense<0.000000e+00> : vector<16x16xf32>
    %150 = tpu.matmul %147, %148, %cst_46 {dimension_numbers = #tpu.dot_dimension_numbers<[1], [1], [0], [0], [0, 0, 1, 0], [], []>} : vector<16x32xf32>, vector<16x32xf32>, vector<16x16xf32> -> vector<16x16xf32>
    %151 = arith.addf %150, %10 : vector<16x16xf32>
    %cst_47 = arith.constant dense<0xFF800000> : vector<16xf32>
    %152 = vector.multi_reduction <maximumf>, %151, %cst_47 [1] : vector<16x16xf32> to vector<16xf32>
    %153 = vector.shape_cast %152 : vector<16xf32> to vector<16x1xf32>
    %154 = vector.broadcast %153 : vector<16x1xf32> to vector<16x16xf32>
    %155 = arith.subf %151, %154 : vector<16x16xf32>
    %156 = math.exp %155 : vector<16x16xf32>
    %cst_48 = arith.constant dense<0.000000e+00> : vector<16xf32>
    %157 = vector.multi_reduction <add>, %156, %cst_48 [1] : vector<16x16xf32> to vector<16xf32>
    %158 = vector.shape_cast %157 : vector<16xf32> to vector<16x1xf32>
    %159 = tpu.reciprocal %158 {approx = true} : vector<16x1xf32> -> vector<16x1xf32>
    %160 = vector.broadcast %159 : vector<16x1xf32> to vector<16x16xf32>
    %161 = arith.mulf %156, %160 : vector<16x16xf32>
    %cst_49 = arith.constant dense<0.000000e+00> : vector<16x32xf32>
    %162 = tpu.matmul %161, %149, %cst_49 {dimension_numbers = #tpu.dot_dimension_numbers<[1], [0], [0], [1], [0, 0, 1, 1], [], []>} : vector<16x16xf32>, vector<16x32xf32>, vector<16x32xf32> -> vector<16x32xf32>
    %163 = vector.extract_strided_slice %12 {offsets = [224, 0], sizes = [32, 32], strides = [1, 1]} : vector<256x32xf32> to vector<32x32xf32>
    %cst_50 = arith.constant dense<0.000000e+00> : vector<16x32xf32>
    %164 = tpu.matmul %162, %163, %cst_50 {dimension_numbers = #tpu.dot_dimension_numbers<[1], [0], [0], [1], [0, 0, 1, 1], [], []>} : vector<16x32xf32>, vector<32x32xf32>, vector<16x32xf32> -> vector<16x32xf32>
    %165 = arith.addf %146, %164 : vector<16x32xf32>
    %c0_51 = arith.constant 0 : index
    %c0_52 = arith.constant 0 : index
    %c0_53 = arith.constant 0 : index
    %166 = vector.load %arg5[%c0_51, %c0_52, %c0_53] : memref<1x1x32xf32, #tpu.memory_space<vmem>>, vector<1x1x32xf32>
    %167 = vector.shape_cast %166 : vector<1x1x32xf32> to vector<1x32xf32>
    %168 = vector.broadcast %167 : vector<1x32xf32> to vector<16x32xf32>
    %169 = arith.addf %165, %168 : vector<16x32xf32>
    %170 = arith.addf %169, %3 : vector<16x32xf32>
    %cst_54 = arith.constant dense<0.000000e+00> : vector<16xf32>
    %171 = vector.multi_reduction <add>, %170, %cst_54 [1] : vector<16x32xf32> to vector<16xf32>
    %172 = vector.shape_cast %171 : vector<16xf32> to vector<16x1xf32>
    %cst_55 = arith.constant 3.200000e+01 : f32
    %173 = vector.broadcast %cst_55 : f32 to vector<16x1xf32>
    %174 = arith.divf %172, %173 : vector<16x1xf32>
    %175 = vector.broadcast %174 : vector<16x1xf32> to vector<16x32xf32>
    %176 = arith.subf %170, %175 : vector<16x32xf32>
    %177 = arith.mulf %176, %176 : vector<16x32xf32>
    %cst_56 = arith.constant dense<0.000000e+00> : vector<16xf32>
    %178 = vector.multi_reduction <add>, %177, %cst_56 [1] : vector<16x32xf32> to vector<16xf32>
    %179 = vector.shape_cast %178 : vector<16xf32> to vector<16x1xf32>
    %cst_57 = arith.constant 3.200000e+01 : f32
    %180 = vector.broadcast %cst_57 : f32 to vector<16x1xf32>
    %181 = arith.divf %179, %180 : vector<16x1xf32>
    %182 = vector.broadcast %174 : vector<16x1xf32> to vector<16x32xf32>
    %183 = arith.subf %170, %182 : vector<16x32xf32>
    %cst_58 = arith.constant 9.99999974E-6 : f32
    %184 = vector.broadcast %cst_58 : f32 to vector<16x1xf32>
    %185 = arith.addf %181, %184 : vector<16x1xf32>
    %186 = math.rsqrt %185 : vector<16x1xf32>
    %187 = vector.broadcast %186 : vector<16x1xf32> to vector<16x32xf32>
    %188 = arith.mulf %183, %187 : vector<16x32xf32>
    %c0_59 = arith.constant 0 : index
    %c0_60 = arith.constant 0 : index
    %c0_61 = arith.constant 0 : index
    %189 = vector.load %arg6[%c0_59, %c0_60, %c0_61] : memref<1x1x32xf32, #tpu.memory_space<vmem>>, vector<1x1x32xf32>
    %190 = vector.shape_cast %189 : vector<1x1x32xf32> to vector<1x32xf32>
    %191 = vector.broadcast %190 : vector<1x32xf32> to vector<16x32xf32>
    %192 = arith.mulf %188, %191 : vector<16x32xf32>
    %c0_62 = arith.constant 0 : index
    %c0_63 = arith.constant 0 : index
    %c0_64 = arith.constant 0 : index
    %193 = vector.load %arg7[%c0_62, %c0_63, %c0_64] : memref<1x1x32xf32, #tpu.memory_space<vmem>>, vector<1x1x32xf32>
    %194 = vector.shape_cast %193 : vector<1x1x32xf32> to vector<1x32xf32>
    %195 = vector.broadcast %194 : vector<1x32xf32> to vector<16x32xf32>
    %196 = arith.addf %192, %195 : vector<16x32xf32>
    %c0_65 = arith.constant 0 : index
    %c0_66 = arith.constant 0 : index
    %c0_67 = arith.constant 0 : index
    %197 = vector.load %arg8[%c0_65, %c0_66, %c0_67] : memref<1x32x128xf32, #tpu.memory_space<vmem>>, vector<1x32x128xf32>
    %198 = vector.shape_cast %197 : vector<1x32x128xf32> to vector<32x128xf32>
    %cst_68 = arith.constant dense<0.000000e+00> : vector<16x128xf32>
    %199 = tpu.matmul %196, %198, %cst_68 {dimension_numbers = #tpu.dot_dimension_numbers<[1], [0], [0], [1], [0, 0, 1, 1], [], []>} : vector<16x32xf32>, vector<32x128xf32>, vector<16x128xf32> -> vector<16x128xf32>
    %c0_69 = arith.constant 0 : index
    %c0_70 = arith.constant 0 : index
    %c0_71 = arith.constant 0 : index
    %200 = vector.load %arg9[%c0_69, %c0_70, %c0_71] : memref<1x1x128xf32, #tpu.memory_space<vmem>>, vector<1x1x128xf32>
    %201 = vector.shape_cast %200 : vector<1x1x128xf32> to vector<1x128xf32>
    %202 = vector.broadcast %201 : vector<1x128xf32> to vector<16x128xf32>
    %203 = arith.addf %199, %202 : vector<16x128xf32>
    %cst_72 = arith.constant 0.000000e+00 : f32
    %204 = vector.broadcast %cst_72 : f32 to vector<16x128xf32>
    %205 = arith.maximumf %203, %204 : vector<16x128xf32>
    %c0_73 = arith.constant 0 : index
    %c0_74 = arith.constant 0 : index
    %c0_75 = arith.constant 0 : index
    %206 = vector.load %arg10[%c0_73, %c0_74, %c0_75] : memref<1x128x32xf32, #tpu.memory_space<vmem>>, vector<1x128x32xf32>
    %207 = vector.shape_cast %206 : vector<1x128x32xf32> to vector<128x32xf32>
    %cst_76 = arith.constant dense<0.000000e+00> : vector<16x32xf32>
    %208 = tpu.matmul %205, %207, %cst_76 {dimension_numbers = #tpu.dot_dimension_numbers<[1], [0], [0], [1], [0, 0, 1, 1], [], []>} : vector<16x128xf32>, vector<128x32xf32>, vector<16x32xf32> -> vector<16x32xf32>
    %c0_77 = arith.constant 0 : index
    %c0_78 = arith.constant 0 : index
    %c0_79 = arith.constant 0 : index
    %209 = vector.load %arg11[%c0_77, %c0_78, %c0_79] : memref<1x1x32xf32, #tpu.memory_space<vmem>>, vector<1x1x32xf32>
    %210 = vector.shape_cast %209 : vector<1x1x32xf32> to vector<1x32xf32>
    %211 = vector.broadcast %210 : vector<1x32xf32> to vector<16x32xf32>
    %212 = arith.addf %208, %211 : vector<16x32xf32>
    %213 = arith.addf %212, %196 : vector<16x32xf32>
    %cst_80 = arith.constant dense<0.000000e+00> : vector<16xf32>
    %214 = vector.multi_reduction <add>, %213, %cst_80 [1] : vector<16x32xf32> to vector<16xf32>
    %215 = vector.shape_cast %214 : vector<16xf32> to vector<16x1xf32>
    %cst_81 = arith.constant 3.200000e+01 : f32
    %216 = vector.broadcast %cst_81 : f32 to vector<16x1xf32>
    %217 = arith.divf %215, %216 : vector<16x1xf32>
    %218 = vector.broadcast %217 : vector<16x1xf32> to vector<16x32xf32>
    %219 = arith.subf %213, %218 : vector<16x32xf32>
    %220 = arith.mulf %219, %219 : vector<16x32xf32>
    %cst_82 = arith.constant dense<0.000000e+00> : vector<16xf32>
    %221 = vector.multi_reduction <add>, %220, %cst_82 [1] : vector<16x32xf32> to vector<16xf32>
    %222 = vector.shape_cast %221 : vector<16xf32> to vector<16x1xf32>
    %cst_83 = arith.constant 3.200000e+01 : f32
    %223 = vector.broadcast %cst_83 : f32 to vector<16x1xf32>
    %224 = arith.divf %222, %223 : vector<16x1xf32>
    %225 = vector.broadcast %217 : vector<16x1xf32> to vector<16x32xf32>
    %226 = arith.subf %213, %225 : vector<16x32xf32>
    %cst_84 = arith.constant 9.99999974E-6 : f32
    %227 = vector.broadcast %cst_84 : f32 to vector<16x1xf32>
    %228 = arith.addf %224, %227 : vector<16x1xf32>
    %229 = math.rsqrt %228 : vector<16x1xf32>
    %230 = vector.broadcast %229 : vector<16x1xf32> to vector<16x32xf32>
    %231 = arith.mulf %226, %230 : vector<16x32xf32>
    %c0_85 = arith.constant 0 : index
    %c0_86 = arith.constant 0 : index
    %c0_87 = arith.constant 0 : index
    %232 = vector.load %arg12[%c0_85, %c0_86, %c0_87] : memref<1x1x32xf32, #tpu.memory_space<vmem>>, vector<1x1x32xf32>
    %233 = vector.shape_cast %232 : vector<1x1x32xf32> to vector<1x32xf32>
    %234 = vector.broadcast %233 : vector<1x32xf32> to vector<16x32xf32>
    %235 = arith.mulf %231, %234 : vector<16x32xf32>
    %c0_88 = arith.constant 0 : index
    %c0_89 = arith.constant 0 : index
    %c0_90 = arith.constant 0 : index
    %236 = vector.load %arg13[%c0_88, %c0_89, %c0_90] : memref<1x1x32xf32, #tpu.memory_space<vmem>>, vector<1x1x32xf32>
    %237 = vector.shape_cast %236 : vector<1x1x32xf32> to vector<1x32xf32>
    %238 = vector.broadcast %237 : vector<1x32xf32> to vector<16x32xf32>
    %239 = arith.addf %235, %238 : vector<16x32xf32>
    %c0_91 = arith.constant 0 : index
    %c0_92 = arith.constant 0 : index
    %240 = vector.load %arg15[%c0_91, %c0_92] : memref<16x32xf32, #tpu.memory_space<vmem>>, vector<16x32xf32>
    tpu.vector_store %arg15[%c0_91, %c0_92], %239 {strides = array<i32>} : memref<16x32xf32, #tpu.memory_space<vmem>>, vector<16x32xf32>,
    %c1_i32 = arith.constant 1 : i32
    %241 = arith.cmpi eq, %arg0, %c1_i32 : i32
    %242 = arith.extui %241 : i1 to i32
    %c0_i32_93 = arith.constant 0 : i32
    %243 = arith.cmpi ne, %242, %c0_i32_93 : i32
    scf.if %243 {
      %244 = vector.shape_cast %239 : vector<16x32xf32> to vector<2x8x32xf32>
      %c0_94 = arith.constant 0 : index
      %c0_95 = arith.constant 0 : index
      %c0_96 = arith.constant 0 : index
      %245 = vector.load %arg14[%c0_94, %c0_95, %c0_96] : memref<2x8x32xf32, #tpu.memory_space<vmem>>, vector<2x8x32xf32>
      tpu.vector_store %arg14[%c0_94, %c0_95, %c0_96], %244 {strides = array<i32>} : memref<2x8x32xf32, #tpu.memory_space<vmem>>, vector<2x8x32xf32>,
    } else {
    }
    return
  }
  func.func @transform_0(%arg0: i32) -> (i32, i32) {
    %c0_i32 = arith.constant 0 : i32
    %c0_i32_0 = arith.constant 0 : i32
    %c0_i32_1 = arith.constant 0 : i32
    return %c0_i32, %c0_i32_0 : i32, i32
  }
  func.func @transform_1(%arg0: i32) -> (i32, i32) {
    %c0_i32 = arith.constant 0 : i32
    %c0_i32_0 = arith.constant 0 : i32
    %c0_i32_1 = arith.constant 0 : i32
    return %c0_i32, %c0_i32_0 : i32, i32
  }
  func.func @transform_2(%arg0: i32) -> (i32, i32, i32) {
    %c0_i32 = arith.constant 0 : i32
    %c0_i32_0 = arith.constant 0 : i32
    %c0_i32_1 = arith.constant 0 : i32
    return %arg0, %c0_i32, %c0_i32_0 : i32, i32, i32
  }
  func.func @transform_3(%arg0: i32) -> (i32, i32, i32) {
    %c0_i32 = arith.constant 0 : i32
    %c0_i32_0 = arith.constant 0 : i32
    %c0_i32_1 = arith.constant 0 : i32
    return %arg0, %c0_i32, %c0_i32_0 : i32, i32, i32
  }
  func.func @transform_4(%arg0: i32) -> (i32, i32, i32) {
    %c0_i32 = arith.constant 0 : i32
    %c0_i32_0 = arith.constant 0 : i32
    %c0_i32_1 = arith.constant 0 : i32
    return %arg0, %c0_i32, %c0_i32_0 : i32, i32, i32
  }
  func.func @transform_5(%arg0: i32) -> (i32, i32, i32) {
    %c0_i32 = arith.constant 0 : i32
    %c0_i32_0 = arith.constant 0 : i32
    %c0_i32_1 = arith.constant 0 : i32
    return %arg0, %c0_i32, %c0_i32_0 : i32, i32, i32
  }
  func.func @transform_6(%arg0: i32) -> (i32, i32, i32) {
    %c0_i32 = arith.constant 0 : i32
    %c0_i32_0 = arith.constant 0 : i32
    %c0_i32_1 = arith.constant 0 : i32
    return %arg0, %c0_i32, %c0_i32_0 : i32, i32, i32
  }
  func.func @transform_7(%arg0: i32) -> (i32, i32, i32) {
    %c0_i32 = arith.constant 0 : i32
    %c0_i32_0 = arith.constant 0 : i32
    %c0_i32_1 = arith.constant 0 : i32
    return %arg0, %c0_i32, %c0_i32_0 : i32, i32, i32
  }
  func.func @transform_8(%arg0: i32) -> (i32, i32, i32) {
    %c0_i32 = arith.constant 0 : i32
    %c0_i32_0 = arith.constant 0 : i32
    %c0_i32_1 = arith.constant 0 : i32
    return %arg0, %c0_i32, %c0_i32_0 : i32, i32, i32
  }
  func.func @transform_9(%arg0: i32) -> (i32, i32, i32) {
    %c0_i32 = arith.constant 0 : i32
    %c0_i32_0 = arith.constant 0 : i32
    %c0_i32_1 = arith.constant 0 : i32
    return %arg0, %c0_i32, %c0_i32_0 : i32, i32, i32
  }
  func.func @transform_10(%arg0: i32) -> (i32, i32, i32) {
    %c0_i32 = arith.constant 0 : i32
    %c0_i32_0 = arith.constant 0 : i32
    %c0_i32_1 = arith.constant 0 : i32
    return %arg0, %c0_i32, %c0_i32_0 : i32, i32, i32
  }
  func.func @transform_11(%arg0: i32) -> (i32, i32, i32) {
    %c0_i32 = arith.constant 0 : i32
    %c0_i32_0 = arith.constant 0 : i32
    %c0_i32_1 = arith.constant 0 : i32
    return %arg0, %c0_i32, %c0_i32_0 : i32, i32, i32
  }
  func.func @transform_12(%arg0: i32) -> (i32, i32, i32) {
    %c0_i32 = arith.constant 0 : i32
    %c0_i32_0 = arith.constant 0 : i32
    %c0_i32_1 = arith.constant 0 : i32
    return %arg0, %c0_i32, %c0_i32_0 : i32, i32, i32
  }
  func.func @transform_13(%arg0: i32) -> (i32, i32, i32) {
    %c0_i32 = arith.constant 0 : i32
    %c0_i32_0 = arith.constant 0 : i32
    %c0_i32_1 = arith.constant 0 : i32
    %c0_i32_2 = arith.constant 0 : i32
    return %c0_i32, %c0_i32_0, %c0_i32_1 : i32, i32, i32
  }
}

</mosaic_0001>

<llo_original>
// kernel: tpu_custom_call.1
$region0: #{tpu_custom_call.1}
  #allocation0 [shape = 'u32[]', space=smem, size = 0x4, offset = 0x4, fixed_abs, tag = 'smem constant byte address 0x4 - core index']
  #allocation1 [shape = 'u32[72,128]{1,0:T(1,128)}', space=vmem, size = 0x9000, scoped, tag = 'internal scratch']
  #allocation2 [shape = 'f32[16,32]{1,0:T(8,128)}', space=vmem, size = 0x2000, scoped, tag = 'scratch operand']
  %s0 = inlined_call_operand.vmem [shape: f32[16,32], index: 0, kind: input, shape index: {}]
  %s1 = inlined_call_operand.vmem [shape: f32[16,16], index: 1, kind: input, shape index: {}]
  %s2 = inlined_call_operand.vmem [shape: f32[2,32,768], index: 2, kind: input, shape index: {}]
  %s3 = inlined_call_operand.vmem [shape: f32[2,256,32], index: 3, kind: input, shape index: {}]
  %s4 = inlined_call_operand.vmem [shape: f32[2,1,32], index: 4, kind: input, shape index: {}]
  %s5 = inlined_call_operand.vmem [shape: f32[2,1,32], index: 5, kind: input, shape index: {}]
  %s6 = inlined_call_operand.vmem [shape: f32[2,1,32], index: 6, kind: input, shape index: {}]
  %s7 = inlined_call_operand.vmem [shape: f32[2,32,128], index: 7, kind: input, shape index: {}]
  %s8 = inlined_call_operand.vmem [shape: f32[2,1,128], index: 8, kind: input, shape index: {}]
  %s9 = inlined_call_operand.vmem [shape: f32[2,128,32], index: 9, kind: input, shape index: {}]
  %s10 = inlined_call_operand.vmem [shape: f32[2,1,32], index: 10, kind: input, shape index: {}]
  %s11 = inlined_call_operand.vmem [shape: f32[2,1,32], index: 11, kind: input, shape index: {}]
  %s12 = inlined_call_operand.vmem [shape: f32[2,1,32], index: 12, kind: input, shape index: {}]
  %s13 = inlined_call_operand.hbm [shape: f32[2,8,32], index: 13, kind: output, shape index: {}]
  %s14 = sld [smem:[#allocation0]]
  $region93: #{tpu_custom_call.1} parent=0
    _
  %s16 = ssub.s32 1, %s14
  %s17 = scalar_select 0, %s16, %s14
  $region1: #{tpu_custom_call.1} parent=0
    #allocation3 [shape = 'u8[8192]{0}', space=vmem, size = 0x2000, scoped, tag = 'output window, operand 0, single buffered']
    #allocation4 [shape = 's32[2]{0}', space=sflag, size = 0x8, scoped, tag = 'scoped memory for tpu_custom_call.1']
    %18 = vsyncpa [#allocation4], 0
    loop: start=0, step=1, limit=4
    $region2: #{tpu_custom_call.1} parent=1 // loop_pre_header
      _
    $region3: #{tpu_custom_call.1} parent=1 // loop_header
      %s20 = sphi 0, %s24
      %p21 = scmp.ge.s32.totalorder %s20, 4
      %s28 = sphi 0, %s28
      %s30 = sphi 0, %s28
      %s31 = sphi 0, %s30
      %s45 = sphi 0, %s31
      %s49 = sphi 0, %s49
      %s51 = sphi 0, %s49
      %s52 = sphi 0, %s51
      %s66 = sphi 0, %s52
      %s72 = sphi 0, %s74
      %s75 = sphi 0, %s72
      %s76 = sphi 0, %s75
      %s92 = sphi 0, %s76
      %s98 = sphi 0, %s100
      %s101 = sphi 0, %s98
      %s102 = sphi 0, %s101
      %s118 = sphi 0, %s102
      %s124 = sphi 0, %s126
      %s127 = sphi 0, %s124
      %s128 = sphi 0, %s127
      %s144 = sphi 0, %s128
      %s150 = sphi 0, %s152
      %s153 = sphi 0, %s150
      %s154 = sphi 0, %s153
      %s170 = sphi 0, %s154
      %s176 = sphi 0, %s178
      %s179 = sphi 0, %s176
      %s180 = sphi 0, %s179
      %s196 = sphi 0, %s180
      %s202 = sphi 0, %s204
      %s205 = sphi 0, %s202
      %s206 = sphi 0, %s205
      %s222 = sphi 0, %s206
      %s228 = sphi 0, %s230
      %s231 = sphi 0, %s228
      %s232 = sphi 0, %s231
      %s248 = sphi 0, %s232
      %s254 = sphi 0, %s256
      %s257 = sphi 0, %s254
      %s258 = sphi 0, %s257
      %s274 = sphi 0, %s258
      %s280 = sphi 0, %s282
      %s283 = sphi 0, %s280
      %s284 = sphi 0, %s283
      %s300 = sphi 0, %s284
      %s306 = sphi 0, %s308
      %s309 = sphi 0, %s306
      %s310 = sphi 0, %s309
      %s326 = sphi 0, %s310
      %s332 = sphi 0, %s334
      %s335 = sphi 0, %s332
      %s336 = sphi 0, %s335
      %s352 = sphi 0, %s336
      %s356 = sphi 0, %s356
      %s358 = sphi 0, %s356
      %s359 = sphi 0, %s358
      %s373 = sphi 0, %s359
    $region4: #{tpu_custom_call.1} parent=1 // loop_header_branch
      %23 = sbr.rel (%p21) target = $region8
    $region5: #{tpu_custom_call.1} parent=1 // loop_body
      %s25 = ssub.s32 %s20, 1
      %s26 = ssub.s32 %s20, 2
      %s27 = sadd.s32 %s20, 1
      %s29 = sadd.s32 %s28, 1
      %p32 = scmp.eq.s32.totalorder %s20, 1
      %p33 = scmp.ne.s32.totalorder %s28, %s30
      %p34 = scmp.eq.s32.totalorder %s20, 0
      %p35 = por %p33, %p34
      %p36 = scmp.ne.s32.totalorder %s28, %s30
      %p37 = scmp.eq.s32.totalorder %s25, 1
      %p38 = por %p36, %p37
      %p39 = scmp.ne.s32.totalorder %s30, %s31
      %p40 = scmp.eq.s32.totalorder %s25, 0
      %p41 = por %p39, %p40
      %p42 = scmp.ne.s32.totalorder %s30, %s31
      %p43 = scmp.eq.s32.totalorder %s26, 1
      %p44 = por %p42, %p43
      %p46 = scmp.ne.s32.totalorder %s31, %s45
      %p47 = scmp.eq.s32.totalorder %s26, 0
      %p48 = por %p46, %p47
      %s50 = sadd.s32 %s49, 1
      %p53 = scmp.eq.s32.totalorder %s20, 1
      %p54 = scmp.ne.s32.totalorder %s49, %s51
      %p55 = scmp.eq.s32.totalorder %s20, 0
      %p56 = por %p54, %p55
      %p57 = scmp.ne.s32.totalorder %s49, %s51
      %p58 = scmp.eq.s32.totalorder %s25, 1
      %p59 = por %p57, %p58
      %p60 = scmp.ne.s32.totalorder %s51, %s52
      %p61 = scmp.eq.s32.totalorder %s25, 0
      %p62 = por %p60, %p61
      %p63 = scmp.ne.s32.totalorder %s51, %s52
      %p64 = scmp.eq.s32.totalorder %s26, 1
      %p65 = por %p63, %p64
      %p67 = scmp.ne.s32.totalorder %s52, %s66
      %p68 = scmp.eq.s32.totalorder %s26, 0
      %p69 = por %p67, %p68
      %s70 = ssub.s32 %s20, %s27
      %p71 = scmp.eq.s32.totalorder %s70, 0
      %s73 = sadd.s32 %s72, 1
      %s74 = scalar_select %p71, %s72, %s73
      %p77 = pneg %p71
      %p78 = scmp.eq.s32.totalorder %s20, 1
      %p79 = por %p77, %p78
      %p80 = scmp.ne.s32.totalorder %s72, %s75
      %p81 = scmp.eq.s32.totalorder %s20, 0
      %p82 = por %p80, %p81
      %p83 = scmp.ne.s32.totalorder %s72, %s75
      %p84 = scmp.eq.s32.totalorder %s25, 1
      %p85 = por %p83, %p84
      %p86 = scmp.ne.s32.totalorder %s75, %s76
      %p87 = scmp.eq.s32.totalorder %s25, 0
      %p88 = por %p86, %p87
      %p89 = scmp.ne.s32.totalorder %s75, %s76
      %p90 = scmp.eq.s32.totalorder %s26, 1
      %p91 = por %p89, %p90
      %p93 = scmp.ne.s32.totalorder %s76, %s92
      %p94 = scmp.eq.s32.totalorder %s26, 0
      %p95 = por %p93, %p94
      %s96 = ssub.s32 %s20, %s27
      %p97 = scmp.eq.s32.totalorder %s96, 0
      %s99 = sadd.s32 %s98, 1
      %s100 = scalar_select %p97, %s98, %s99
      %p103 = pneg %p97
      %p104 = scmp.eq.s32.totalorder %s20, 1
      %p105 = por %p103, %p104
      %p106 = scmp.ne.s32.totalorder %s98, %s101
      %p107 = scmp.eq.s32.totalorder %s20, 0
      %p108 = por %p106, %p107
      %p109 = scmp.ne.s32.totalorder %s98, %s101
      %p110 = scmp.eq.s32.totalorder %s25, 1
      %p111 = por %p109, %p110
      %p112 = scmp.ne.s32.totalorder %s101, %s102
      %p113 = scmp.eq.s32.totalorder %s25, 0
      %p114 = por %p112, %p113
      %p115 = scmp.ne.s32.totalorder %s101, %s102
      %p116 = scmp.eq.s32.totalorder %s26, 1
      %p117 = por %p115, %p116
      %p119 = scmp.ne.s32.totalorder %s102, %s118
      %p120 = scmp.eq.s32.totalorder %s26, 0
      %p121 = por %p119, %p120
      %s122 = ssub.s32 %s20, %s27
      %p123 = scmp.eq.s32.totalorder %s122, 0
      %s125 = sadd.s32 %s124, 1
      %s126 = scalar_select %p123, %s124, %s125
      %p129 = pneg %p123
      %p130 = scmp.eq.s32.totalorder %s20, 1
      %p131 = por %p129, %p130
      %p132 = scmp.ne.s32.totalorder %s124, %s127
      %p133 = scmp.eq.s32.totalorder %s20, 0
      %p134 = por %p132, %p133
      %p135 = scmp.ne.s32.totalorder %s124, %s127
      %p136 = scmp.eq.s32.totalorder %s25, 1
      %p137 = por %p135, %p136
      %p138 = scmp.ne.s32.totalorder %s127, %s128
      %p139 = scmp.eq.s32.totalorder %s25, 0
      %p140 = por %p138, %p139
      %p141 = scmp.ne.s32.totalorder %s127, %s128
      %p142 = scmp.eq.s32.totalorder %s26, 1
      %p143 = por %p141, %p142
      %p145 = scmp.ne.s32.totalorder %s128, %s144
      %p146 = scmp.eq.s32.totalorder %s26, 0
      %p147 = por %p145, %p146
      %s148 = ssub.s32 %s20, %s27
      %p149 = scmp.eq.s32.totalorder %s148, 0
      %s151 = sadd.s32 %s150, 1
      %s152 = scalar_select %p149, %s150, %s151
      %p155 = pneg %p149
      %p156 = scmp.eq.s32.totalorder %s20, 1
      %p157 = por %p155, %p156
      %p158 = scmp.ne.s32.totalorder %s150, %s153
      %p159 = scmp.eq.s32.totalorder %s20, 0
      %p160 = por %p158, %p159
      %p161 = scmp.ne.s32.totalorder %s150, %s153
      %p162 = scmp.eq.s32.totalorder %s25, 1
      %p163 = por %p161, %p162
      %p164 = scmp.ne.s32.totalorder %s153, %s154
      %p165 = scmp.eq.s32.totalorder %s25, 0
      %p166 = por %p164, %p165
      %p167 = scmp.ne.s32.totalorder %s153, %s154
      %p168 = scmp.eq.s32.totalorder %s26, 1
      %p169 = por %p167, %p168
      %p171 = scmp.ne.s32.totalorder %s154, %s170
      %p172 = scmp.eq.s32.totalorder %s26, 0
      %p173 = por %p171, %p172
      %s174 = ssub.s32 %s20, %s27
      %p175 = scmp.eq.s32.totalorder %s174, 0
      %s177 = sadd.s32 %s176, 1
      %s178 = scalar_select %p175, %s176, %s177
      %p181 = pneg %p175
      %p182 = scmp.eq.s32.totalorder %s20, 1
      %p183 = por %p181, %p182
      %p184 = scmp.ne.s32.totalorder %s176, %s179
      %p185 = scmp.eq.s32.totalorder %s20, 0
      %p186 = por %p184, %p185
      %p187 = scmp.ne.s32.totalorder %s176, %s179
      %p188 = scmp.eq.s32.totalorder %s25, 1
      %p189 = por %p187, %p188
      %p190 = scmp.ne.s32.totalorder %s179, %s180
      %p191 = scmp.eq.s32.totalorder %s25, 0
      %p192 = por %p190, %p191
      %p193 = scmp.ne.s32.totalorder %s179, %s180
      %p194 = scmp.eq.s32.totalorder %s26, 1
      %p195 = por %p193, %p194
      %p197 = scmp.ne.s32.totalorder %s180, %s196
      %p198 = scmp.eq.s32.totalorder %s26, 0
      %p199 = por %p197, %p198
      %s200 = ssub.s32 %s20, %s27
      %p201 = scmp.eq.s32.totalorder %s200, 0
      %s203 = sadd.s32 %s202, 1
      %s204 = scalar_select %p201, %s202, %s203
      %p207 = pneg %p201
      %p208 = scmp.eq.s32.totalorder %s20, 1
      %p209 = por %p207, %p208
      %p210 = scmp.ne.s32.totalorder %s202, %s205
      %p211 = scmp.eq.s32.totalorder %s20, 0
      %p212 = por %p210, %p211
      %p213 = scmp.ne.s32.totalorder %s202, %s205
      %p214 = scmp.eq.s32.totalorder %s25, 1
      %p215 = por %p213, %p214
      %p216 = scmp.ne.s32.totalorder %s205, %s206
      %p217 = scmp.eq.s32.totalorder %s25, 0
      %p218 = por %p216, %p217
      %p219 = scmp.ne.s32.totalorder %s205, %s206
      %p220 = scmp.eq.s32.totalorder %s26, 1
      %p221 = por %p219, %p220
      %p223 = scmp.ne.s32.totalorder %s206, %s222
      %p224 = scmp.eq.s32.totalorder %s26, 0
      %p225 = por %p223, %p224
      %s226 = ssub.s32 %s20, %s27
      %p227 = scmp.eq.s32.totalorder %s226, 0
      %s229 = sadd.s32 %s228, 1
      %s230 = scalar_select %p227, %s228, %s229
      %p233 = pneg %p227
      %p234 = scmp.eq.s32.totalorder %s20, 1
      %p235 = por %p233, %p234
      %p236 = scmp.ne.s32.totalorder %s228, %s231
      %p237 = scmp.eq.s32.totalorder %s20, 0
      %p238 = por %p236, %p237
      %p239 = scmp.ne.s32.totalorder %s228, %s231
      %p240 = scmp.eq.s32.totalorder %s25, 1
      %p241 = por %p239, %p240
      %p242 = scmp.ne.s32.totalorder %s231, %s232
      %p243 = scmp.eq.s32.totalorder %s25, 0
      %p244 = por %p242, %p243
      %p245 = scmp.ne.s32.totalorder %s231, %s232
      %p246 = scmp.eq.s32.totalorder %s26, 1
      %p247 = por %p245, %p246
      %p249 = scmp.ne.s32.totalorder %s232, %s248
      %p250 = scmp.eq.s32.totalorder %s26, 0
      %p251 = por %p249, %p250
      %s252 = ssub.s32 %s20, %s27
      %p253 = scmp.eq.s32.totalorder %s252, 0
      %s255 = sadd.s32 %s254, 1
      %s256 = scalar_select %p253, %s254, %s255
      %p259 = pneg %p253
      %p260 = scmp.eq.s32.totalorder %s20, 1
      %p261 = por %p259, %p260
      %p262 = scmp.ne.s32.totalorder %s254, %s257
      %p263 = scmp.eq.s32.totalorder %s20, 0
      %p264 = por %p262, %p263
      %p265 = scmp.ne.s32.totalorder %s254, %s257
      %p266 = scmp.eq.s32.totalorder %s25, 1
      %p267 = por %p265, %p266
      %p268 = scmp.ne.s32.totalorder %s257, %s258
      %p269 = scmp.eq.s32.totalorder %s25, 0
      %p270 = por %p268, %p269
      %p271 = scmp.ne.s32.totalorder %s257, %s258
      %p272 = scmp.eq.s32.totalorder %s26, 1
      %p273 = por %p271, %p272
      %p275 = scmp.ne.s32.totalorder %s258, %s274
      %p276 = scmp.eq.s32.totalorder %s26, 0
      %p277 = por %p275, %p276
      %s278 = ssub.s32 %s20, %s27
      %p279 = scmp.eq.s32.totalorder %s278, 0
      %s281 = sadd.s32 %s280, 1
      %s282 = scalar_select %p279, %s280, %s281
      %p285 = pneg %p279
      %p286 = scmp.eq.s32.totalorder %s20, 1
      %p287 = por %p285, %p286
      %p288 = scmp.ne.s32.totalorder %s280, %s283
      %p289 = scmp.eq.s32.totalorder %s20, 0
      %p290 = por %p288, %p289
      %p291 = scmp.ne.s32.totalorder %s280, %s283
      %p292 = scmp.eq.s32.totalorder %s25, 1
      %p293 = por %p291, %p292
      %p294 = scmp.ne.s32.totalorder %s283, %s284
      %p295 = scmp.eq.s32.totalorder %s25, 0
      %p296 = por %p294, %p295
      %p297 = scmp.ne.s32.totalorder %s283, %s284
      %p298 = scmp.eq.s32.totalorder %s26, 1
      %p299 = por %p297, %p298
      %p301 = scmp.ne.s32.totalorder %s284, %s300
      %p302 = scmp.eq.s32.totalorder %s26, 0
      %p303 = por %p301, %p302
      %s304 = ssub.s32 %s20, %s27
      %p305 = scmp.eq.s32.totalorder %s304, 0
      %s307 = sadd.s32 %s306, 1
      %s308 = scalar_select %p305, %s306, %s307
      %p311 = pneg %p305
      %p312 = scmp.eq.s32.totalorder %s20, 1
      %p313 = por %p311, %p312
      %p314 = scmp.ne.s32.totalorder %s306, %s309
      %p315 = scmp.eq.s32.totalorder %s20, 0
      %p316 = por %p314, %p315
      %p317 = scmp.ne.s32.totalorder %s306, %s309
      %p318 = scmp.eq.s32.totalorder %s25, 1
      %p319 = por %p317, %p318
      %p320 = scmp.ne.s32.totalorder %s309, %s310
      %p321 = scmp.eq.s32.totalorder %s25, 0
      %p322 = por %p320, %p321
      %p323 = scmp.ne.s32.totalorder %s309, %s310
      %p324 = scmp.eq.s32.totalorder %s26, 1
      %p325 = por %p323, %p324
      %p327 = scmp.ne.s32.totalorder %s310, %s326
      %p328 = scmp.eq.s32.totalorder %s26, 0
      %p329 = por %p327, %p328
      %s330 = ssub.s32 %s20, %s27
      %p331 = scmp.eq.s32.totalorder %s330, 0
      %s333 = sadd.s32 %s332, 1
      %s334 = scalar_select %p331, %s332, %s333
      %p337 = pneg %p331
      %p338 = scmp.eq.s32.totalorder %s20, 1
      %p339 = por %p337, %p338
      %p340 = scmp.ne.s32.totalorder %s332, %s335
      %p341 = scmp.eq.s32.totalorder %s20, 0
      %p342 = por %p340, %p341
      %p343 = scmp.ne.s32.totalorder %s332, %s335
      %p344 = scmp.eq.s32.totalorder %s25, 1
      %p345 = por %p343, %p344
      %p346 = scmp.ne.s32.totalorder %s335, %s336
      %p347 = scmp.eq.s32.totalorder %s25, 0
      %p348 = por %p346, %p347
      %p349 = scmp.ne.s32.totalorder %s335, %s336
      %p350 = scmp.eq.s32.totalorder %s26, 1
      %p351 = por %p349, %p350
      %p353 = scmp.ne.s32.totalorder %s336, %s352
      %p354 = scmp.eq.s32.totalorder %s26, 0
      %p355 = por %p353, %p354
      %s357 = sadd.s32 %s356, 1
      %p360 = scmp.eq.s32.totalorder %s20, 1
      %p361 = scmp.ne.s32.totalorder %s356, %s358
      %p362 = scmp.eq.s32.totalorder %s20, 0
      %p363 = por %p361, %p362
      %p364 = scmp.ne.s32.totalorder %s356, %s358
      %p365 = scmp.eq.s32.totalorder %s25, 1
      %p366 = por %p364, %p365
      %p367 = scmp.ne.s32.totalorder %s358, %s359
      %p368 = scmp.eq.s32.totalorder %s25, 0
      %p369 = por %p367, %p368
      %p370 = scmp.ne.s32.totalorder %s358, %s359
      %p371 = scmp.eq.s32.totalorder %s26, 1
      %p372 = por %p370, %p371
      %p374 = scmp.ne.s32.totalorder %s359, %s373
      %p375 = scmp.eq.s32.totalorder %s26, 0
      %p376 = por %p374, %p375
      %p377 = scmp.le.s32.totalorder 1, %s20
      %p378 = scmp.lt.s32.totalorder %s20, 3
      %p379 = pnand %p377, %p378
      %p380 = pneg %p379
      // Predicated region
      $region9: #{tpu_custom_call.1} parent=5 // pred_check
        _
      $region10: #{tpu_custom_call.1} parent=5 // pred_check_branch
        %382 = sbr.rel (%p379) target = $region12
      $region11: #{tpu_custom_call.1} parent=5 // pred_region
        %s383 = ssub.s32 %s20, 1
        // Predicated region
        $region13: #{tpu_custom_call.1} parent=11 // pred_check
          %p384 = pneg %p41
        $region14: #{tpu_custom_call.1} parent=11 // pred_check_branch
          %386 = sbr.rel (%p384) target = $region16
        $region15: #{tpu_custom_call.1} parent=11 // pred_region
          _
        $region16: #{tpu_custom_call.1} parent=11 // pred_fallthru
          _
        // Predicated region
        $region17: #{tpu_custom_call.1} parent=11 // pred_check
          %p387 = pneg %p62
        $region18: #{tpu_custom_call.1} parent=11 // pred_check_branch
          %389 = sbr.rel (%p387) target = $region20
        $region19: #{tpu_custom_call.1} parent=11 // pred_region
          _
        $region20: #{tpu_custom_call.1} parent=11 // pred_fallthru
          _
      $region12: #{tpu_custom_call.1} parent=5 // pred_fallthru
        _
      %p390 = scmp.lt.s32.totalorder %s20, 2
      // Predicated region
      $region21: #{tpu_custom_call.1} parent=5 // pred_check
        %p391 = pneg %p390
      $region22: #{tpu_custom_call.1} parent=5 // pred_check_branch
        %393 = sbr.rel (%p391) target = $region24
      $region23: #{tpu_custom_call.1} parent=5 // pred_region
        // Predicated region
        $region25: #{tpu_custom_call.1} parent=23 // pred_check
          %p394 = pneg %p82
        $region26: #{tpu_custom_call.1} parent=23 // pred_check_branch
          %396 = sbr.rel (%p394) target = $region28
        $region27: #{tpu_custom_call.1} parent=23 // pred_region
          %p397 = scmp.lt.s32.totalorder %s20, 1
          %s398 = scalar_select %p397, %s20, 1
          %s399 = smul.addr %s398, 24
          %s400 = smul.addr %s399, 8
          %s401 = scalar_lea.vmem %s2, %s400
        $region28: #{tpu_custom_call.1} parent=23 // pred_fallthru
          _
        // Predicated region
        $region29: #{tpu_custom_call.1} parent=23 // pred_check
          %p402 = pneg %p108
        $region30: #{tpu_custom_call.1} parent=23 // pred_check_branch
          %404 = sbr.rel (%p402) target = $region32
        $region31: #{tpu_custom_call.1} parent=23 // pred_region
          %p405 = scmp.lt.s32.totalorder %s20, 1
          %s406 = scalar_select %p405, %s20, 1
          %s407 = smul.addr %s406, 32
          %s408 = smul.addr %s407, 8
          %s409 = scalar_lea.vmem %s3, %s408
        $region32: #{tpu_custom_call.1} parent=23 // pred_fallthru
          _
        // Predicated region
        $region33: #{tpu_custom_call.1} parent=23 // pred_check
          %p410 = pneg %p134
        $region34: #{tpu_custom_call.1} parent=23 // pred_check_branch
          %412 = sbr.rel (%p410) target = $region36
        $region35: #{tpu_custom_call.1} parent=23 // pred_region
          %p413 = scmp.lt.s32.totalorder %s20, 1
          %s414 = scalar_select %p413, %s20, 1
          %s415 = scalar_lea.vmem %s4, %s414
        $region36: #{tpu_custom_call.1} parent=23 // pred_fallthru
          _
        // Predicated region
        $region37: #{tpu_custom_call.1} parent=23 // pred_check
          %p416 = pneg %p160
        $region38: #{tpu_custom_call.1} parent=23 // pred_check_branch
          %418 = sbr.rel (%p416) target = $region40
        $region39: #{tpu_custom_call.1} parent=23 // pred_region
          %p419 = scmp.lt.s32.totalorder %s20, 1
          %s420 = scalar_select %p419, %s20, 1
          %s421 = scalar_lea.vmem %s5, %s420
        $region40: #{tpu_custom_call.1} parent=23 // pred_fallthru
          _
        // Predicated region
        $region41: #{tpu_custom_call.1} parent=23 // pred_check
          %p422 = pneg %p186
        $region42: #{tpu_custom_call.1} parent=23 // pred_check_branch
          %424 = sbr.rel (%p422) target = $region44
        $region43: #{tpu_custom_call.1} parent=23 // pred_region
          %p425 = scmp.lt.s32.totalorder %s20, 1
          %s426 = scalar_select %p425, %s20, 1
          %s427 = scalar_lea.vmem %s6, %s426
        $region44: #{tpu_custom_call.1} parent=23 // pred_fallthru
          _
        // Predicated region
        $region45: #{tpu_custom_call.1} parent=23 // pred_check
          %p428 = pneg %p212
        $region46: #{tpu_custom_call.1} parent=23 // pred_check_branch
          %430 = sbr.rel (%p428) target = $region48
        $region47: #{tpu_custom_call.1} parent=23 // pred_region
          %p431 = scmp.lt.s32.totalorder %s20, 1
          %s432 = scalar_select %p431, %s20, 1
          %s433 = smul.addr %s432, 4
          %s434 = smul.addr %s433, 8
          %s435 = scalar_lea.vmem %s7, %s434
        $region48: #{tpu_custom_call.1} parent=23 // pred_fallthru
          _
        // Predicated region
        $region49: #{tpu_custom_call.1} parent=23 // pred_check
          %p436 = pneg %p238
        $region50: #{tpu_custom_call.1} parent=23 // pred_check_branch
          %438 = sbr.rel (%p436) target = $region52
        $region51: #{tpu_custom_call.1} parent=23 // pred_region
          %p439 = scmp.lt.s32.totalorder %s20, 1
          %s440 = scalar_select %p439, %s20, 1
          %s441 = scalar_lea.vmem %s8, %s440
        $region52: #{tpu_custom_call.1} parent=23 // pred_fallthru
          _
        // Predicated region
        $region53: #{tpu_custom_call.1} parent=23 // pred_check
          %p442 = pneg %p264
        $region54: #{tpu_custom_call.1} parent=23 // pred_check_branch
          %444 = sbr.rel (%p442) target = $region56
        $region55: #{tpu_custom_call.1} parent=23 // pred_region
          %p445 = scmp.lt.s32.totalorder %s20, 1
          %s446 = scalar_select %p445, %s20, 1
          %s447 = smul.addr %s446, 16
          %s448 = smul.addr %s447, 8
          %s449 = scalar_lea.vmem %s9, %s448
        $region56: #{tpu_custom_call.1} parent=23 // pred_fallthru
          _
        // Predicated region
        $region57: #{tpu_custom_call.1} parent=23 // pred_check
          %p450 = pneg %p290
        $region58: #{tpu_custom_call.1} parent=23 // pred_check_branch
          %452 = sbr.rel (%p450) target = $region60
        $region59: #{tpu_custom_call.1} parent=23 // pred_region
          %p453 = scmp.lt.s32.totalorder %s20, 1
          %s454 = scalar_select %p453, %s20, 1
          %s455 = scalar_lea.vmem %s10, %s454
        $region60: #{tpu_custom_call.1} parent=23 // pred_fallthru
          _
        // Predicated region
        $region61: #{tpu_custom_call.1} parent=23 // pred_check
          %p456 = pneg %p316
        $region62: #{tpu_custom_call.1} parent=23 // pred_check_branch
          %458 = sbr.rel (%p456) target = $region64
        $region63: #{tpu_custom_call.1} parent=23 // pred_region
          %p459 = scmp.lt.s32.totalorder %s20, 1
          %s460 = scalar_select %p459, %s20, 1
          %s461 = scalar_lea.vmem %s11, %s460
        $region64: #{tpu_custom_call.1} parent=23 // pred_fallthru
          _
        // Predicated region
        $region65: #{tpu_custom_call.1} parent=23 // pred_check
          %p462 = pneg %p342
        $region66: #{tpu_custom_call.1} parent=23 // pred_check_branch
          %464 = sbr.rel (%p462) target = $region68
        $region67: #{tpu_custom_call.1} parent=23 // pred_region
          %p465 = scmp.lt.s32.totalorder %s20, 1
          %s466 = scalar_select %p465, %s20, 1
          %s467 = scalar_lea.vmem %s12, %s466
        $region68: #{tpu_custom_call.1} parent=23 // pred_fallthru
          _
      $region24: #{tpu_custom_call.1} parent=5 // pred_fallthru
        _
      %p468 = scmp.le.s32.totalorder 1, %s20
      %p469 = scmp.lt.s32.totalorder %s20, 3
      %p470 = pnand %p468, %p469
      %p471 = pneg %p470
      // Predicated region
      $region69: #{tpu_custom_call.1} parent=5 // pred_check
        _
      $region70: #{tpu_custom_call.1} parent=5 // pred_check_branch
        %473 = sbr.rel (%p470) target = $region72
      $region71: #{tpu_custom_call.1} parent=5 // pred_region
        %s474 = ssub.s32 %s20, 1
        %p475 = pneg %p41
        %p476 = pneg %p38
        %p477 = pneg %p62
        %p478 = pneg %p59
        %p479 = scmp.lt.s32.totalorder %s25, 1
        %s480 = scalar_select %p479, %s25, 1
        %s481 = smul.addr %s480, 24
        %s482 = smul.addr %s481, 8
        %s483 = scalar_lea.vmem %s2, %s482
        %p484 = pneg %p88
        %p485 = pneg %p85
        %p486 = scmp.lt.s32.totalorder %s25, 1
        %s487 = scalar_select %p486, %s25, 1
        %s488 = smul.addr %s487, 32
        %s489 = smul.addr %s488, 8
        %s490 = scalar_lea.vmem %s3, %s489
        %p491 = pneg %p114
        %p492 = pneg %p111
        %p493 = scmp.lt.s32.totalorder %s25, 1
        %s494 = scalar_select %p493, %s25, 1
        %s495 = scalar_lea.vmem %s4, %s494
        %p496 = pneg %p140
        %p497 = pneg %p137
        %p498 = scmp.lt.s32.totalorder %s25, 1
        %s499 = scalar_select %p498, %s25, 1
        %s500 = scalar_lea.vmem %s5, %s499
        %p501 = pneg %p166
        %p502 = pneg %p163
        %p503 = scmp.lt.s32.totalorder %s25, 1
        %s504 = scalar_select %p503, %s25, 1
        %s505 = scalar_lea.vmem %s6, %s504
        %p506 = pneg %p192
        %p507 = pneg %p189
        %p508 = scmp.lt.s32.totalorder %s25, 1
        %s509 = scalar_select %p508, %s25, 1
        %s510 = smul.addr %s509, 4
        %s511 = smul.addr %s510, 8
        %s512 = scalar_lea.vmem %s7, %s511
        %p513 = pneg %p218
        %p514 = pneg %p215
        %p515 = scmp.lt.s32.totalorder %s25, 1
        %s516 = scalar_select %p515, %s25, 1
        %s517 = scalar_lea.vmem %s8, %s516
        %p518 = pneg %p244
        %p519 = pneg %p241
        %p520 = scmp.lt.s32.totalorder %s25, 1
        %s521 = scalar_select %p520, %s25, 1
        %s522 = smul.addr %s521, 16
        %s523 = smul.addr %s522, 8
        %s524 = scalar_lea.vmem %s9, %s523
        %p525 = pneg %p270
        %p526 = pneg %p267
        %p527 = scmp.lt.s32.totalorder %s25, 1
        %s528 = scalar_select %p527, %s25, 1
        %s529 = scalar_lea.vmem %s10, %s528
        %p530 = pneg %p296
        %p531 = pneg %p293
        %p532 = scmp.lt.s32.totalorder %s25, 1
        %s533 = scalar_select %p532, %s25, 1
        %s534 = scalar_lea.vmem %s11, %s533
        %p535 = pneg %p322
        %p536 = pneg %p319
        %p537 = scmp.lt.s32.totalorder %s25, 1
        %s538 = scalar_select %p537, %s25, 1
        %s539 = scalar_lea.vmem %s12, %s538
        %p540 = pneg %p348
        %p541 = pneg %p345
        %p542 = pneg %p369
        %p543 = pneg %p366
        %p544 = scmp.lt.s32.totalorder %s25, 1
        %s545 = scalar_select %p544, %s25, 1
        %s546 = smul.addr %s545, 24
        %s547 = smul.addr %s546, 8
        %s548 = scalar_lea.vmem %s2, %s547
        %p549 = scmp.lt.s32.totalorder %s25, 1
        %s550 = scalar_select %p549, %s25, 1
        %s551 = smul.addr %s550, 32
        %s552 = smul.addr %s551, 8
        %s553 = scalar_lea.vmem %s3, %s552
        %p554 = scmp.lt.s32.totalorder %s25, 1
        %s555 = scalar_select %p554, %s25, 1
        %s556 = scalar_lea.vmem %s4, %s555
        %p557 = scmp.lt.s32.totalorder %s25, 1
        %s558 = scalar_select %p557, %s25, 1
        %s559 = scalar_lea.vmem %s5, %s558
        %p560 = scmp.lt.s32.totalorder %s25, 1
        %s561 = scalar_select %p560, %s25, 1
        %s562 = scalar_lea.vmem %s6, %s561
        %p563 = scmp.lt.s32.totalorder %s25, 1
        %s564 = scalar_select %p563, %s25, 1
        %s565 = smul.addr %s564, 4
        %s566 = smul.addr %s565, 8
        %s567 = scalar_lea.vmem %s7, %s566
        %p568 = scmp.lt.s32.totalorder %s25, 1
        %s569 = scalar_select %p568, %s25, 1
        %s570 = scalar_lea.vmem %s8, %s569
        %p571 = scmp.lt.s32.totalorder %s25, 1
        %s572 = scalar_select %p571, %s25, 1
        %s573 = smul.addr %s572, 16
        %s574 = smul.addr %s573, 8
        %s575 = scalar_lea.vmem %s9, %s574
        %p576 = scmp.lt.s32.totalorder %s25, 1
        %s577 = scalar_select %p576, %s25, 1
        %s578 = scalar_lea.vmem %s10, %s577
        %p579 = scmp.lt.s32.totalorder %s25, 1
        %s580 = scalar_select %p579, %s25, 1
        %s581 = scalar_lea.vmem %s11, %s580
        %p582 = scmp.lt.s32.totalorder %s25, 1
        %s583 = scalar_select %p582, %s25, 1
        %s584 = scalar_lea.vmem %s12, %s583
        %p585 = scmp.eq.s32.totalorder %s25, 0
        // Predicated region
        $region73: #{tpu_custom_call.1} parent=71 // pred_check
          %p586 = pneg %p585
        $region74: #{tpu_custom_call.1} parent=71 // pred_check_branch
          %588 = sbr.rel (%p586) target = $region76
        $region75: #{tpu_custom_call.1} parent=71 // pred_region
          %v589 = vld [vmem:[%s0] sm:$0xff]
          %v590 = vld [vmem:[%s0 + $0x8] sm:$0xff]
          %vm591 = vcmask 261120
          %592 = vst.msk [vmem:[#allocation2] sm:$0xff] %vm591, %v589
          %593 = vst.msk [vmem:[#allocation2 + $0x8] sm:$0xff] %vm591, %v590
        $region76: #{tpu_custom_call.1} parent=71 // pred_fallthru
          _
        %v594 = vld [vmem:[#allocation2] sm:$0xff]
        %v595 = vld [vmem:[#allocation2 + $0x8] sm:$0xff]
        %v596 = vld [vmem:[%s548] sm:$0xff]
        %v597 = vld [vmem:[%s548 + $0x8] sm:$0xff]
        %v598 = vld [vmem:[%s548 + $0x10] sm:$0xff]
        %v599 = vld [vmem:[%s548 + $0x18] sm:$0xff]
        %v600 = vld [vmem:[%s548 + $0x20] sm:$0xff]
        %v601 = vld [vmem:[%s548 + $0x28] sm:$0xff]
        %v602 = vld [vmem:[%s548 + $0x30] sm:$0xff]
        %v603 = vld [vmem:[%s548 + $0x38] sm:$0xff]
        %v604 = vld [vmem:[%s548 + $0x40] sm:$0xff]
        %v605 = vld [vmem:[%s548 + $0x48] sm:$0xff]
        %v606 = vld [vmem:[%s548 + $0x50] sm:$0xff]
        %v607 = vld [vmem:[%s548 + $0x58] sm:$0xff]
        %v608 = vld [vmem:[%s548 + $0x60] sm:$0xff]
        %v609 = vld [vmem:[%s548 + $0x68] sm:$0xff]
        %v610 = vld [vmem:[%s548 + $0x70] sm:$0xff]
        %v611 = vld [vmem:[%s548 + $0x78] sm:$0xff]
        %v612 = vld [vmem:[%s548 + $0x80] sm:$0xff]
        %v613 = vld [vmem:[%s548 + $0x88] sm:$0xff]
        %v614 = vld [vmem:[%s548 + $0x90] sm:$0xff]
        %v615 = vld [vmem:[%s548 + $0x98] sm:$0xff]
        %v616 = vld [vmem:[%s548 + $0xa0] sm:$0xff]
        %v617 = vld [vmem:[%s548 + $0xa8] sm:$0xff]
        %v618 = vld [vmem:[%s548 + $0xb0] sm:$0xff]
        %v619 = vld [vmem:[%s548 + $0xb8] sm:$0xff]
        %vm620 = vcmask 261120
        %v622 = vsel %vm620, %v594, 0
        %v625 = vsel %vm620, %v595, 0
        %627 = vmatpush.msra.mxu0 0.0
        %628 = vmatpush.msra.mxu0 0.0
        %629 = vmatpush.msra.mxu0 0.0
        %630 = vmatpush.msra.mxu0 0.0
        %631 = vmatpush.msra.mxu0 0.0
        %632 = vmatpush.msra.mxu0 0.0
        %633 = vmatpush.msra.mxu0 0.0
        %634 = vmatpush.msra.mxu0 0.0
        %635 = vmatpush.msra.mxu0 0.0
        %636 = vmatpush.msra.mxu0 0.0
        %637 = vmatpush.msra.mxu0 0.0
        %638 = vmatpush.msra.mxu0 0.0
        %639 = vmatpush.msra.mxu0 %v614
        %640 = vmatpush.msra.mxu0 %v608
        %641 = vmatpush.msra.mxu0 %v602
        %642 = vmatpush.msra.mxu0 %v596
        %643 = vmatmul.f32.gmra.mxu0 %v622
        %v644 = vpop.f32.mrf.mxu0
        %v645 = vadd.f32 0.0, %v644
        %646 = vmatmul.f32.gmra.mxu0 %v625
        %v647 = vpop.f32.mrf.mxu0
        %v648 = vadd.f32 0.0, %v647
        %649 = vdwg.mxu0
        %650 = vmatpush.msra.mxu0 0.0
        %651 = vmatpush.msra.mxu0 0.0
        %652 = vmatpush.msra.mxu0 0.0
        %653 = vmatpush.msra.mxu0 0.0
        %654 = vmatpush.msra.mxu0 0.0
        %655 = vmatpush.msra.mxu0 0.0
        %656 = vmatpush.msra.mxu0 0.0
        %657 = vmatpush.msra.mxu0 0.0
        %658 = vmatpush.msra.mxu0 0.0
        %659 = vmatpush.msra.mxu0 0.0
        %660 = vmatpush.msra.mxu0 0.0
        %661 = vmatpush.msra.mxu0 0.0
        %662 = vmatpush.msra.mxu0 %v615
        %663 = vmatpush.msra.mxu0 %v609
        %664 = vmatpush.msra.mxu0 %v603
        %665 = vmatpush.msra.mxu0 %v597
        %666 = vmatmul.f32.gmra.mxu0 %v622
        %v667 = vpop.f32.mrf.mxu0
        %v668 = vadd.f32 0.0, %v667
        %669 = vmatmul.f32.gmra.mxu0 %v625
        %v670 = vpop.f32.mrf.mxu0
        %v671 = vadd.f32 0.0, %v670
        %672 = vdwg.mxu0
        %673 = vmatpush.msra.mxu0 0.0
        %674 = vmatpush.msra.mxu0 0.0
        %675 = vmatpush.msra.mxu0 0.0
        %676 = vmatpush.msra.mxu0 0.0
        %677 = vmatpush.msra.mxu0 0.0
        %678 = vmatpush.msra.mxu0 0.0
        %679 = vmatpush.msra.mxu0 0.0
        %680 = vmatpush.msra.mxu0 0.0
        %681 = vmatpush.msra.mxu0 0.0
        %682 = vmatpush.msra.mxu0 0.0
        %683 = vmatpush.msra.mxu0 0.0
        %684 = vmatpush.msra.mxu0 0.0
        %685 = vmatpush.msra.mxu0 %v616
        %686 = vmatpush.msra.mxu0 %v610
        %687 = vmatpush.msra.mxu0 %v604
        %688 = vmatpush.msra.mxu0 %v598
        %689 = vmatmul.f32.gmra.mxu0 %v622
        %v690 = vpop.f32.mrf.mxu0
        %v691 = vadd.f32 0.0, %v690
        %692 = vmatmul.f32.gmra.mxu0 %v625
        %v693 = vpop.f32.mrf.mxu0
        %v694 = vadd.f32 0.0, %v693
        %695 = vdwg.mxu0
        %696 = vmatpush.msra.mxu0 0.0
        %697 = vmatpush.msra.mxu0 0.0
        %698 = vmatpush.msra.mxu0 0.0
        %699 = vmatpush.msra.mxu0 0.0
        %700 = vmatpush.msra.mxu0 0.0
        %701 = vmatpush.msra.mxu0 0.0
        %702 = vmatpush.msra.mxu0 0.0
        %703 = vmatpush.msra.mxu0 0.0
        %704 = vmatpush.msra.mxu0 0.0
        %705 = vmatpush.msra.mxu0 0.0
        %706 = vmatpush.msra.mxu0 0.0
        %707 = vmatpush.msra.mxu0 0.0
        %708 = vmatpush.msra.mxu0 %v617
        %709 = vmatpush.msra.mxu0 %v611
        %710 = vmatpush.msra.mxu0 %v605
        %711 = vmatpush.msra.mxu0 %v599
        %712 = vmatmul.f32.gmra.mxu0 %v622
        %v713 = vpop.f32.mrf.mxu0
        %v714 = vadd.f32 0.0, %v713
        %715 = vmatmul.f32.gmra.mxu0 %v625
        %v716 = vpop.f32.mrf.mxu0
        %v717 = vadd.f32 0.0, %v716
        %718 = vdwg.mxu0
        %719 = vmatpush.msra.mxu0 0.0
        %720 = vmatpush.msra.mxu0 0.0
        %721 = vmatpush.msra.mxu0 0.0
        %722 = vmatpush.msra.mxu0 0.0
        %723 = vmatpush.msra.mxu0 0.0
        %724 = vmatpush.msra.mxu0 0.0
        %725 = vmatpush.msra.mxu0 0.0
        %726 = vmatpush.msra.mxu0 0.0
        %727 = vmatpush.msra.mxu0 0.0
        %728 = vmatpush.msra.mxu0 0.0
        %729 = vmatpush.msra.mxu0 0.0
        %730 = vmatpush.msra.mxu0 0.0
        %731 = vmatpush.msra.mxu0 %v618
        %732 = vmatpush.msra.mxu0 %v612
        %733 = vmatpush.msra.mxu0 %v606
        %734 = vmatpush.msra.mxu0 %v600
        %735 = vmatmul.f32.gmra.mxu0 %v622
        %v736 = vpop.f32.mrf.mxu0
        %v737 = vadd.f32 0.0, %v736
        %738 = vmatmul.f32.gmra.mxu0 %v625
        %v739 = vpop.f32.mrf.mxu0
        %v740 = vadd.f32 0.0, %v739
        %741 = vdwg.mxu0
        %742 = vmatpush.msra.mxu0 0.0
        %743 = vmatpush.msra.mxu0 0.0
        %744 = vmatpush.msra.mxu0 0.0
        %745 = vmatpush.msra.mxu0 0.0
        %746 = vmatpush.msra.mxu0 0.0
        %747 = vmatpush.msra.mxu0 0.0
        %748 = vmatpush.msra.mxu0 0.0
        %749 = vmatpush.msra.mxu0 0.0
        %750 = vmatpush.msra.mxu0 0.0
        %751 = vmatpush.msra.mxu0 0.0
        %752 = vmatpush.msra.mxu0 0.0
        %753 = vmatpush.msra.mxu0 0.0
        %754 = vmatpush.msra.mxu0 %v619
        %755 = vmatpush.msra.mxu0 %v613
        %756 = vmatpush.msra.mxu0 %v607
        %757 = vmatpush.msra.mxu0 %v601
        %758 = vmatmul.f32.gmra.mxu0 %v622
        %v759 = vpop.f32.mrf.mxu0
        %v760 = vadd.f32 0.0, %v759
        %761 = vmatmul.f32.gmra.mxu0 %v625
        %v762 = vpop.f32.mrf.mxu0
        %v763 = vadd.f32 0.0, %v762
        %764 = vdwg.mxu0
        %v765 = vld [vmem:[%s1] sm:$0xff]
        %v766 = vld [vmem:[%s1 + $0x8] sm:$0xff]
        %v767 = vld [vmem:[%s553] sm:$0xff]
        %v768 = vld [vmem:[%s553 + $0x8] sm:$0xff]
        %v769 = vld [vmem:[%s553 + $0x10] sm:$0xff]
        %v770 = vld [vmem:[%s553 + $0x18] sm:$0xff]
        %v771 = vld [vmem:[%s553 + $0x20] sm:$0xff]
        %v772 = vld [vmem:[%s553 + $0x28] sm:$0xff]
        %v773 = vld [vmem:[%s553 + $0x30] sm:$0xff]
        %v774 = vld [vmem:[%s553 + $0x38] sm:$0xff]
        %v775 = vld [vmem:[%s553 + $0x40] sm:$0xff]
        %v776 = vld [vmem:[%s553 + $0x48] sm:$0xff]
        %v777 = vld [vmem:[%s553 + $0x50] sm:$0xff]
        %v778 = vld [vmem:[%s553 + $0x58] sm:$0xff]
        %v779 = vld [vmem:[%s553 + $0x60] sm:$0xff]
        %v780 = vld [vmem:[%s553 + $0x68] sm:$0xff]
        %v781 = vld [vmem:[%s553 + $0x70] sm:$0xff]
        %v782 = vld [vmem:[%s553 + $0x78] sm:$0xff]
        %v783 = vld [vmem:[%s553 + $0x80] sm:$0xff]
        %v784 = vld [vmem:[%s553 + $0x88] sm:$0xff]
        %v785 = vld [vmem:[%s553 + $0x90] sm:$0xff]
        %v786 = vld [vmem:[%s553 + $0x98] sm:$0xff]
        %v787 = vld [vmem:[%s553 + $0xa0] sm:$0xff]
        %v788 = vld [vmem:[%s553 + $0xa8] sm:$0xff]
        %v789 = vld [vmem:[%s553 + $0xb0] sm:$0xff]
        %v790 = vld [vmem:[%s553 + $0xb8] sm:$0xff]
        %v791 = vld [vmem:[%s553 + $0xc0] sm:$0xff]
        %v792 = vld [vmem:[%s553 + $0xc8] sm:$0xff]
        %v793 = vld [vmem:[%s553 + $0xd0] sm:$0xff]
        %v794 = vld [vmem:[%s553 + $0xd8] sm:$0xff]
        %v795 = vld [vmem:[%s553 + $0xe0] sm:$0xff]
        %v796 = vld [vmem:[%s553 + $0xe8] sm:$0xff]
        %v797 = vld [vmem:[%s553 + $0xf0] sm:$0xff]
        %v798 = vld [vmem:[%s553 + $0xf8] sm:$0xff]
        %v800 = vsel %vm620, %v645, 0
        %v803 = vsel %vm620, %v648, 0
        %v806 = vsel %vm620, %v691, 0
        %v809 = vsel %vm620, %v694, 0
        %811 = vmatpush.xpose.msra.mxu0 0.0
        %812 = vmatpush.xpose.msra.mxu0 0.0
        %813 = vmatpush.xpose.msra.mxu0 0.0
        %814 = vmatpush.xpose.msra.mxu0 0.0
        %815 = vmatpush.xpose.msra.mxu0 0.0
        %816 = vmatpush.xpose.msra.mxu0 0.0
        %817 = vmatpush.xpose.msra.mxu0 0.0
        %818 = vmatpush.xpose.msra.mxu0 0.0
        %819 = vmatpush.xpose.msra.mxu0 0.0
        %820 = vmatpush.xpose.msra.mxu0 0.0
        %821 = vmatpush.xpose.msra.mxu0 0.0
        %822 = vmatpush.xpose.msra.mxu0 0.0
        %823 = vmatpush.xpose.msra.mxu0 0.0
        %824 = vmatpush.xpose.msra.mxu0 0.0
        %825 = vmatpush.xpose.msra.mxu0 %v809
        %826 = vmatpush.xpose.msra.mxu0 %v806
        %827 = vmatmul.f32.gmra.mxu0 %v800
        %v828 = vpop.f32.mrf.mxu0
        %v829 = vadd.f32 %v765, %v828
        %830 = vmatmul.f32.gmra.mxu0 %v803
        %v831 = vpop.f32.mrf.mxu0
        %v832 = vadd.f32 %v766, %v831
        %833 = vdwg.mxu0
        %vm834 = vcmask 130048
        %v835 = vsel %vm834, %v829, -inf
        %836 = vmax.xlane.f32.xlu0 %v835
        %v837 = vpop.xlane.xlu0 %836
        %v838 = vsel %vm834, %v832, -inf
        %839 = vmax.xlane.f32.xlu0 %v838
        %v840 = vpop.xlane.xlu0 %839
        %v841 = vsub.f32 %v829, %v837
        %v842 = vsub.f32 %v832, %v840
        %v843 = vmul.f32 %v841, 1.442695
        %v844 = vpow.pop %v843
        %v845 = vmul.f32 %v842, 1.442695
        %v846 = vpow.pop %v845
        %v847 = vsel %vm834, %v844, 0.0
        %848 = vadd.xlane.f32.xlu0 %v847
        %v849 = vpop.xlane.xlu0 %848
        %v850 = vsel %vm834, %v846, 0.0
        %851 = vadd.xlane.f32.xlu0 %v850
        %v852 = vpop.xlane.xlu0 %851
        %v853 = vrcp.pop %v849
        %v854 = vrcp.pop %v852
        %v855 = vmul.f32 %v844, %v853
        %v856 = vmul.f32 %v846, %v854
        %v858 = vsel %vm834, %v855, 0
        %v861 = vsel %vm834, %v856, 0
        %863 = vmatpush.msra.mxu0 0.0
        %864 = vmatpush.msra.mxu0 0.0
        %865 = vmatpush.msra.mxu0 0.0
        %866 = vmatpush.msra.mxu0 0.0
        %867 = vmatpush.msra.mxu0 0.0
        %868 = vmatpush.msra.mxu0 0.0
        %869 = vmatpush.msra.mxu0 0.0
        %870 = vmatpush.msra.mxu0 0.0
        %871 = vmatpush.msra.mxu0 0.0
        %872 = vmatpush.msra.mxu0 0.0
        %873 = vmatpush.msra.mxu0 0.0
        %874 = vmatpush.msra.mxu0 0.0
        %875 = vmatpush.msra.mxu0 0.0
        %876 = vmatpush.msra.mxu0 0.0
        %877 = vmatpush.msra.mxu0 %v740
        %878 = vmatpush.msra.mxu0 %v737
        %879 = vmatmul.f32.gmra.mxu0 %v858
        %v880 = vpop.f32.mrf.mxu0
        %v881 = vadd.f32 0.0, %v880
        %882 = vmatmul.f32.gmra.mxu0 %v861
        %v883 = vpop.f32.mrf.mxu0
        %v884 = vadd.f32 0.0, %v883
        %885 = vdwg.mxu0
        %886 = vrot.lane.b32.xlu0 %v645, 96
        %v887 = vpop.permute.xlu0 %886
        %888 = vrot.lane.b32.xlu0 %v648, 96
        %v889 = vpop.permute.xlu0 %888
        %890 = vrot.lane.b32.xlu0 %v691, 96
        %v891 = vpop.permute.xlu0 %890
        %892 = vrot.lane.b32.xlu0 %v694, 96
        %v893 = vpop.permute.xlu0 %892
        %v894 = vsel %vm620, %v887, 0
        %v896 = vsel %vm620, %v889, 0
        %v898 = vsel %vm620, %v891, 0
        %v900 = vsel %vm620, %v893, 0
        %902 = vmatpush.xpose.msra.mxu0 0.0
        %903 = vmatpush.xpose.msra.mxu0 0.0
        %904 = vmatpush.xpose.msra.mxu0 0.0
        %905 = vmatpush.xpose.msra.mxu0 0.0
        %906 = vmatpush.xpose.msra.mxu0 0.0
        %907 = vmatpush.xpose.msra.mxu0 0.0
        %908 = vmatpush.xpose.msra.mxu0 0.0
        %909 = vmatpush.xpose.msra.mxu0 0.0
        %910 = vmatpush.xpose.msra.mxu0 0.0
        %911 = vmatpush.xpose.msra.mxu0 0.0
        %912 = vmatpush.xpose.msra.mxu0 0.0
        %913 = vmatpush.xpose.msra.mxu0 0.0
        %914 = vmatpush.xpose.msra.mxu0 0.0
        %915 = vmatpush.xpose.msra.mxu0 0.0
        %916 = vmatpush.xpose.msra.mxu0 %v900
        %917 = vmatpush.xpose.msra.mxu0 %v898
        %918 = vmatmul.f32.gmra.mxu0 %v894
        %v919 = vpop.f32.mrf.mxu0
        %v920 = vadd.f32 %v765, %v919
        %921 = vmatmul.f32.gmra.mxu0 %v896
        %v922 = vpop.f32.mrf.mxu0
        %v923 = vadd.f32 %v766, %v922
        %924 = vdwg.mxu0
        %v925 = vsel %vm834, %v920, -inf
        %926 = vmax.xlane.f32.xlu0 %v925
        %v927 = vpop.xlane.xlu0 %926
        %v928 = vsel %vm834, %v923, -inf
        %929 = vmax.xlane.f32.xlu0 %v928
        %v930 = vpop.xlane.xlu0 %929
        %v931 = vsub.f32 %v920, %v927
        %v932 = vsub.f32 %v923, %v930
        %v933 = vmul.f32 %v931, 1.442695
        %v934 = vpow.pop %v933
        %v935 = vmul.f32 %v932, 1.442695
        %v936 = vpow.pop %v935
        %v937 = vsel %vm834, %v934, 0.0
        %938 = vadd.xlane.f32.xlu0 %v937
        %v939 = vpop.xlane.xlu0 %938
        %v940 = vsel %vm834, %v936, 0.0
        %941 = vadd.xlane.f32.xlu0 %v940
        %v942 = vpop.xlane.xlu0 %941
        %v943 = vrcp.pop %v939
        %v944 = vrcp.pop %v942
        %v945 = vmul.f32 %v934, %v943
        %v946 = vmul.f32 %v936, %v944
        %949 = vrot.lane.b32.xlu0 %v737, 96
        %v950 = vpop.permute.xlu0 %949
        %951 = vrot.lane.b32.xlu0 %v740, 96
        %v952 = vpop.permute.xlu0 %951
        %v956 = vsel %vm834, %v945, 0
        %v959 = vsel %vm834, %v946, 0
        %961 = vmatpush.msra.mxu0 0.0
        %962 = vmatpush.msra.mxu0 0.0
        %963 = vmatpush.msra.mxu0 0.0
        %964 = vmatpush.msra.mxu0 0.0
        %965 = vmatpush.msra.mxu0 0.0
        %966 = vmatpush.msra.mxu0 0.0
        %967 = vmatpush.msra.mxu0 0.0
        %968 = vmatpush.msra.mxu0 0.0
        %969 = vmatpush.msra.mxu0 0.0
        %970 = vmatpush.msra.mxu0 0.0
        %971 = vmatpush.msra.mxu0 0.0
        %972 = vmatpush.msra.mxu0 0.0
        %973 = vmatpush.msra.mxu0 0.0
        %974 = vmatpush.msra.mxu0 0.0
        %975 = vmatpush.msra.mxu0 %v952
        %976 = vmatpush.msra.mxu0 %v950
        %977 = vmatmul.f32.gmra.mxu0 %v956
        %v978 = vpop.f32.mrf.mxu0
        %v979 = vadd.f32 0.0, %v978
        %980 = vmatmul.f32.gmra.mxu0 %v959
        %v981 = vpop.f32.mrf.mxu0
        %v982 = vadd.f32 0.0, %v981
        %983 = vdwg.mxu0
        %v985 = vsel %vm620, %v979, 0
        %v988 = vsel %vm620, %v982, 0
        %990 = vmatpush.msra.mxu0 0.0
        %991 = vmatpush.msra.mxu0 0.0
        %992 = vmatpush.msra.mxu0 0.0
        %993 = vmatpush.msra.mxu0 0.0
        %994 = vmatpush.msra.mxu0 0.0
        %995 = vmatpush.msra.mxu0 0.0
        %996 = vmatpush.msra.mxu0 0.0
        %997 = vmatpush.msra.mxu0 0.0
        %998 = vmatpush.msra.mxu0 0.0
        %999 = vmatpush.msra.mxu0 0.0
        %1000 = vmatpush.msra.mxu0 0.0
        %1001 = vmatpush.msra.mxu0 0.0
        %1002 = vmatpush.msra.mxu0 %v774
        %1003 = vmatpush.msra.mxu0 %v773
        %1004 = vmatpush.msra.mxu0 %v772
        %1005 = vmatpush.msra.mxu0 %v771
        %1006 = vmatmul.f32.gmra.mxu0 %v985
        %v1007 = vpop.f32.mrf.mxu0
        %v1008 = vadd.f32 0.0, %v1007
        %1009 = vmatmul.f32.gmra.mxu0 %v988
        %v1010 = vpop.f32.mrf.mxu0
        %v1011 = vadd.f32 0.0, %v1010
        %1012 = vdwg.mxu0
        %v1014 = vsel %vm620, %v881, 0
        %v1017 = vsel %vm620, %v884, 0
        %1019 = vmatpush.msra.mxu0 0.0
        %1020 = vmatpush.msra.mxu0 0.0
        %1021 = vmatpush.msra.mxu0 0.0
        %1022 = vmatpush.msra.mxu0 0.0
        %1023 = vmatpush.msra.mxu0 0.0
        %1024 = vmatpush.msra.mxu0 0.0
        %1025 = vmatpush.msra.mxu0 0.0
        %1026 = vmatpush.msra.mxu0 0.0
        %1027 = vmatpush.msra.mxu0 0.0
        %1028 = vmatpush.msra.mxu0 0.0
        %1029 = vmatpush.msra.mxu0 0.0
        %1030 = vmatpush.msra.mxu0 0.0
        %1031 = vmatpush.msra.mxu0 %v770
        %1032 = vmatpush.msra.mxu0 %v769
        %1033 = vmatpush.msra.mxu0 %v768
        %1034 = vmatpush.msra.mxu0 %v767
        %1035 = vmatmul.f32.gmra.mxu0 %v1014
        %v1036 = vpop.f32.mrf.mxu0
        %v1037 = vadd.f32 %v1008, %v1036
        %1038 = vmatmul.f32.gmra.mxu0 %v1017
        %v1039 = vpop.f32.mrf.mxu0
        %v1040 = vadd.f32 %v1011, %v1039
        %1041 = vdwg.mxu0
        %1042 = vrot.lane.b32.xlu0 %v645, 64
        %v1043 = vpop.permute.xlu0 %1042
        %1044 = vrot.lane.b32.xlu0 %v648, 64
        %v1045 = vpop.permute.xlu0 %1044
        %1046 = vrot.lane.b32.xlu0 %v691, 64
        %v1047 = vpop.permute.xlu0 %1046
        %1048 = vrot.lane.b32.xlu0 %v694, 64
        %v1049 = vpop.permute.xlu0 %1048
        %v1050 = vsel %vm620, %v1043, 0
        %v1052 = vsel %vm620, %v1045, 0
        %v1054 = vsel %vm620, %v1047, 0
        %v1056 = vsel %vm620, %v1049, 0
        %1058 = vmatpush.xpose.msra.mxu0 0.0
        %1059 = vmatpush.xpose.msra.mxu0 0.0
        %1060 = vmatpush.xpose.msra.mxu0 0.0
        %1061 = vmatpush.xpose.msra.mxu0 0.0
        %1062 = vmatpush.xpose.msra.mxu0 0.0
        %1063 = vmatpush.xpose.msra.mxu0 0.0
        %1064 = vmatpush.xpose.msra.mxu0 0.0
        %1065 = vmatpush.xpose.msra.mxu0 0.0
        %1066 = vmatpush.xpose.msra.mxu0 0.0
        %1067 = vmatpush.xpose.msra.mxu0 0.0
        %1068 = vmatpush.xpose.msra.mxu0 0.0
        %1069 = vmatpush.xpose.msra.mxu0 0.0
        %1070 = vmatpush.xpose.msra.mxu0 0.0
        %1071 = vmatpush.xpose.msra.mxu0 0.0
        %1072 = vmatpush.xpose.msra.mxu0 %v1056
        %1073 = vmatpush.xpose.msra.mxu0 %v1054
        %1074 = vmatmul.f32.gmra.mxu0 %v1050
        %v1075 = vpop.f32.mrf.mxu0
        %v1076 = vadd.f32 %v765, %v1075
        %1077 = vmatmul.f32.gmra.mxu0 %v1052
        %v1078 = vpop.f32.mrf.mxu0
        %v1079 = vadd.f32 %v766, %v1078
        %1080 = vdwg.mxu0
        %v1081 = vsel %vm834, %v1076, -inf
        %1082 = vmax.xlane.f32.xlu0 %v1081
        %v1083 = vpop.xlane.xlu0 %1082
        %v1084 = vsel %vm834, %v1079, -inf
        %1085 = vmax.xlane.f32.xlu0 %v1084
        %v1086 = vpop.xlane.xlu0 %1085
        %v1087 = vsub.f32 %v1076, %v1083
        %v1088 = vsub.f32 %v1079, %v1086
        %v1089 = vmul.f32 %v1087, 1.442695
        %v1090 = vpow.pop %v1089
        %v1091 = vmul.f32 %v1088, 1.442695
        %v1092 = vpow.pop %v1091
        %v1093 = vsel %vm834, %v1090, 0.0
        %1094 = vadd.xlane.f32.xlu0 %v1093
        %v1095 = vpop.xlane.xlu0 %1094
        %v1096 = vsel %vm834, %v1092, 0.0
        %1097 = vadd.xlane.f32.xlu0 %v1096
        %v1098 = vpop.xlane.xlu0 %1097
        %v1099 = vrcp.pop %v1095
        %v1100 = vrcp.pop %v1098
        %v1101 = vmul.f32 %v1090, %v1099
        %v1102 = vmul.f32 %v1092, %v1100
        %1103 = vrot.lane.b32.xlu0 %v737, 64
        %v1104 = vpop.permute.xlu0 %1103
        %1105 = vrot.lane.b32.xlu0 %v740, 64
        %v1106 = vpop.permute.xlu0 %1105
        %v1110 = vsel %vm834, %v1101, 0
        %v1113 = vsel %vm834, %v1102, 0
        %1115 = vmatpush.msra.mxu0 0.0
        %1116 = vmatpush.msra.mxu0 0.0
        %1117 = vmatpush.msra.mxu0 0.0
        %1118 = vmatpush.msra.mxu0 0.0
        %1119 = vmatpush.msra.mxu0 0.0
        %1120 = vmatpush.msra.mxu0 0.0
        %1121 = vmatpush.msra.mxu0 0.0
        %1122 = vmatpush.msra.mxu0 0.0
        %1123 = vmatpush.msra.mxu0 0.0
        %1124 = vmatpush.msra.mxu0 0.0
        %1125 = vmatpush.msra.mxu0 0.0
        %1126 = vmatpush.msra.mxu0 0.0
        %1127 = vmatpush.msra.mxu0 0.0
        %1128 = vmatpush.msra.mxu0 0.0
        %1129 = vmatpush.msra.mxu0 %v1106
        %1130 = vmatpush.msra.mxu0 %v1104
        %1131 = vmatmul.f32.gmra.mxu0 %v1110
        %v1132 = vpop.f32.mrf.mxu0
        %v1133 = vadd.f32 0.0, %v1132
        %1134 = vmatmul.f32.gmra.mxu0 %v1113
        %v1135 = vpop.f32.mrf.mxu0
        %v1136 = vadd.f32 0.0, %v1135
        %1137 = vdwg.mxu0
        %v1139 = vsel %vm620, %v1133, 0
        %v1142 = vsel %vm620, %v1136, 0
        %1144 = vmatpush.msra.mxu0 0.0
        %1145 = vmatpush.msra.mxu0 0.0
        %1146 = vmatpush.msra.mxu0 0.0
        %1147 = vmatpush.msra.mxu0 0.0
        %1148 = vmatpush.msra.mxu0 0.0
        %1149 = vmatpush.msra.mxu0 0.0
        %1150 = vmatpush.msra.mxu0 0.0
        %1151 = vmatpush.msra.mxu0 0.0
        %1152 = vmatpush.msra.mxu0 0.0
        %1153 = vmatpush.msra.mxu0 0.0
        %1154 = vmatpush.msra.mxu0 0.0
        %1155 = vmatpush.msra.mxu0 0.0
        %1156 = vmatpush.msra.mxu0 %v778
        %1157 = vmatpush.msra.mxu0 %v777
        %1158 = vmatpush.msra.mxu0 %v776
        %1159 = vmatpush.msra.mxu0 %v775
        %1160 = vmatmul.f32.gmra.mxu0 %v1139
        %v1161 = vpop.f32.mrf.mxu0
        %v1162 = vadd.f32 0.0, %v1161
        %1163 = vmatmul.f32.gmra.mxu0 %v1142
        %v1164 = vpop.f32.mrf.mxu0
        %v1165 = vadd.f32 0.0, %v1164
        %1166 = vdwg.mxu0
        %v1167 = vadd.f32 %v1037, %v1162
        %v1168 = vadd.f32 %v1040, %v1165
        %1169 = vrot.lane.b32.xlu0 %v645, 32
        %v1170 = vpop.permute.xlu0 %1169
        %1171 = vrot.lane.b32.xlu0 %v648, 32
        %v1172 = vpop.permute.xlu0 %1171
        %1173 = vrot.lane.b32.xlu0 %v691, 32
        %v1174 = vpop.permute.xlu0 %1173
        %1175 = vrot.lane.b32.xlu0 %v694, 32
        %v1176 = vpop.permute.xlu0 %1175
        %v1177 = vsel %vm620, %v1170, 0
        %v1179 = vsel %vm620, %v1172, 0
        %v1181 = vsel %vm620, %v1174, 0
        %v1183 = vsel %vm620, %v1176, 0
        %1185 = vmatpush.xpose.msra.mxu0 0.0
        %1186 = vmatpush.xpose.msra.mxu0 0.0
        %1187 = vmatpush.xpose.msra.mxu0 0.0
        %1188 = vmatpush.xpose.msra.mxu0 0.0
        %1189 = vmatpush.xpose.msra.mxu0 0.0
        %1190 = vmatpush.xpose.msra.mxu0 0.0
        %1191 = vmatpush.xpose.msra.mxu0 0.0
        %1192 = vmatpush.xpose.msra.mxu0 0.0
        %1193 = vmatpush.xpose.msra.mxu0 0.0
        %1194 = vmatpush.xpose.msra.mxu0 0.0
        %1195 = vmatpush.xpose.msra.mxu0 0.0
        %1196 = vmatpush.xpose.msra.mxu0 0.0
        %1197 = vmatpush.xpose.msra.mxu0 0.0
        %1198 = vmatpush.xpose.msra.mxu0 0.0
        %1199 = vmatpush.xpose.msra.mxu0 %v1183
        %1200 = vmatpush.xpose.msra.mxu0 %v1181
        %1201 = vmatmul.f32.gmra.mxu0 %v1177
        %v1202 = vpop.f32.mrf.mxu0
        %v1203 = vadd.f32 %v765, %v1202
        %1204 = vmatmul.f32.gmra.mxu0 %v1179
        %v1205 = vpop.f32.mrf.mxu0
        %v1206 = vadd.f32 %v766, %v1205
        %1207 = vdwg.mxu0
        %v1208 = vsel %vm834, %v1203, -inf
        %1209 = vmax.xlane.f32.xlu0 %v1208
        %v1210 = vpop.xlane.xlu0 %1209
        %v1211 = vsel %vm834, %v1206, -inf
        %1212 = vmax.xlane.f32.xlu0 %v1211
        %v1213 = vpop.xlane.xlu0 %1212
        %v1214 = vsub.f32 %v1203, %v1210
        %v1215 = vsub.f32 %v1206, %v1213
        %v1216 = vmul.f32 %v1214, 1.442695
        %v1217 = vpow.pop %v1216
        %v1218 = vmul.f32 %v1215, 1.442695
        %v1219 = vpow.pop %v1218
        %v1220 = vsel %vm834, %v1217, 0.0
        %1221 = vadd.xlane.f32.xlu0 %v1220
        %v1222 = vpop.xlane.xlu0 %1221
        %v1223 = vsel %vm834, %v1219, 0.0
        %1224 = vadd.xlane.f32.xlu0 %v1223
        %v1225 = vpop.xlane.xlu0 %1224
        %v1226 = vrcp.pop %v1222
        %v1227 = vrcp.pop %v1225
        %v1228 = vmul.f32 %v1217, %v1226
        %v1229 = vmul.f32 %v1219, %v1227
        %1230 = vrot.lane.b32.xlu0 %v737, 32
        %v1231 = vpop.permute.xlu0 %1230
        %1232 = vrot.lane.b32.xlu0 %v740, 32
        %v1233 = vpop.permute.xlu0 %1232
        %v1237 = vsel %vm834, %v1228, 0
        %v1240 = vsel %vm834, %v1229, 0
        %1242 = vmatpush.msra.mxu0 0.0
        %1243 = vmatpush.msra.mxu0 0.0
        %1244 = vmatpush.msra.mxu0 0.0
        %1245 = vmatpush.msra.mxu0 0.0
        %1246 = vmatpush.msra.mxu0 0.0
        %1247 = vmatpush.msra.mxu0 0.0
        %1248 = vmatpush.msra.mxu0 0.0
        %1249 = vmatpush.msra.mxu0 0.0
        %1250 = vmatpush.msra.mxu0 0.0
        %1251 = vmatpush.msra.mxu0 0.0
        %1252 = vmatpush.msra.mxu0 0.0
        %1253 = vmatpush.msra.mxu0 0.0
        %1254 = vmatpush.msra.mxu0 0.0
        %1255 = vmatpush.msra.mxu0 0.0
        %1256 = vmatpush.msra.mxu0 %v1233
        %1257 = vmatpush.msra.mxu0 %v1231
        %1258 = vmatmul.f32.gmra.mxu0 %v1237
        %v1259 = vpop.f32.mrf.mxu0
        %v1260 = vadd.f32 0.0, %v1259
        %1261 = vmatmul.f32.gmra.mxu0 %v1240
        %v1262 = vpop.f32.mrf.mxu0
        %v1263 = vadd.f32 0.0, %v1262
        %1264 = vdwg.mxu0
        %v1266 = vsel %vm620, %v1260, 0
        %v1269 = vsel %vm620, %v1263, 0
        %1271 = vmatpush.msra.mxu0 0.0
        %1272 = vmatpush.msra.mxu0 0.0
        %1273 = vmatpush.msra.mxu0 0.0
        %1274 = vmatpush.msra.mxu0 0.0
        %1275 = vmatpush.msra.mxu0 0.0
        %1276 = vmatpush.msra.mxu0 0.0
        %1277 = vmatpush.msra.mxu0 0.0
        %1278 = vmatpush.msra.mxu0 0.0
        %1279 = vmatpush.msra.mxu0 0.0
        %1280 = vmatpush.msra.mxu0 0.0
        %1281 = vmatpush.msra.mxu0 0.0
        %1282 = vmatpush.msra.mxu0 0.0
        %1283 = vmatpush.msra.mxu0 %v782
        %1284 = vmatpush.msra.mxu0 %v781
        %1285 = vmatpush.msra.mxu0 %v780
        %1286 = vmatpush.msra.mxu0 %v779
        %1287 = vmatmul.f32.gmra.mxu0 %v1266
        %v1288 = vpop.f32.mrf.mxu0
        %v1289 = vadd.f32 0.0, %v1288
        %1290 = vmatmul.f32.gmra.mxu0 %v1269
        %v1291 = vpop.f32.mrf.mxu0
        %v1292 = vadd.f32 0.0, %v1291
        %1293 = vdwg.mxu0
        %v1294 = vadd.f32 %v1167, %v1289
        %v1295 = vadd.f32 %v1168, %v1292
        %v1297 = vsel %vm620, %v668, 0
        %v1300 = vsel %vm620, %v671, 0
        %v1303 = vsel %vm620, %v714, 0
        %v1306 = vsel %vm620, %v717, 0
        %1308 = vmatpush.xpose.msra.mxu0 0.0
        %1309 = vmatpush.xpose.msra.mxu0 0.0
        %1310 = vmatpush.xpose.msra.mxu0 0.0
        %1311 = vmatpush.xpose.msra.mxu0 0.0
        %1312 = vmatpush.xpose.msra.mxu0 0.0
        %1313 = vmatpush.xpose.msra.mxu0 0.0
        %1314 = vmatpush.xpose.msra.mxu0 0.0
        %1315 = vmatpush.xpose.msra.mxu0 0.0
        %1316 = vmatpush.xpose.msra.mxu0 0.0
        %1317 = vmatpush.xpose.msra.mxu0 0.0
        %1318 = vmatpush.xpose.msra.mxu0 0.0
        %1319 = vmatpush.xpose.msra.mxu0 0.0
        %1320 = vmatpush.xpose.msra.mxu0 0.0
        %1321 = vmatpush.xpose.msra.mxu0 0.0
        %1322 = vmatpush.xpose.msra.mxu0 %v1306
        %1323 = vmatpush.xpose.msra.mxu0 %v1303
        %1324 = vmatmul.f32.gmra.mxu0 %v1297
        %v1325 = vpop.f32.mrf.mxu0
        %v1326 = vadd.f32 %v765, %v1325
        %1327 = vmatmul.f32.gmra.mxu0 %v1300
        %v1328 = vpop.f32.mrf.mxu0
        %v1329 = vadd.f32 %v766, %v1328
        %1330 = vdwg.mxu0
        %v1331 = vsel %vm834, %v1326, -inf
        %1332 = vmax.xlane.f32.xlu0 %v1331
        %v1333 = vpop.xlane.xlu0 %1332
        %v1334 = vsel %vm834, %v1329, -inf
        %1335 = vmax.xlane.f32.xlu0 %v1334
        %v1336 = vpop.xlane.xlu0 %1335
        %v1337 = vsub.f32 %v1326, %v1333
        %v1338 = vsub.f32 %v1329, %v1336
        %v1339 = vmul.f32 %v1337, 1.442695
        %v1340 = vpow.pop %v1339
        %v1341 = vmul.f32 %v1338, 1.442695
        %v1342 = vpow.pop %v1341
        %v1343 = vsel %vm834, %v1340, 0.0
        %1344 = vadd.xlane.f32.xlu0 %v1343
        %v1345 = vpop.xlane.xlu0 %1344
        %v1346 = vsel %vm834, %v1342, 0.0
        %1347 = vadd.xlane.f32.xlu0 %v1346
        %v1348 = vpop.xlane.xlu0 %1347
        %v1349 = vrcp.pop %v1345
        %v1350 = vrcp.pop %v1348
        %v1351 = vmul.f32 %v1340, %v1349
        %v1352 = vmul.f32 %v1342, %v1350
        %v1354 = vsel %vm834, %v1351, 0
        %v1357 = vsel %vm834, %v1352, 0
        %1359 = vmatpush.msra.mxu0 0.0
        %1360 = vmatpush.msra.mxu0 0.0
        %1361 = vmatpush.msra.mxu0 0.0
        %1362 = vmatpush.msra.mxu0 0.0
        %1363 = vmatpush.msra.mxu0 0.0
        %1364 = vmatpush.msra.mxu0 0.0
        %1365 = vmatpush.msra.mxu0 0.0
        %1366 = vmatpush.msra.mxu0 0.0
        %1367 = vmatpush.msra.mxu0 0.0
        %1368 = vmatpush.msra.mxu0 0.0
        %1369 = vmatpush.msra.mxu0 0.0
        %1370 = vmatpush.msra.mxu0 0.0
        %1371 = vmatpush.msra.mxu0 0.0
        %1372 = vmatpush.msra.mxu0 0.0
        %1373 = vmatpush.msra.mxu0 %v763
        %1374 = vmatpush.msra.mxu0 %v760
        %1375 = vmatmul.f32.gmra.mxu0 %v1354
        %v1376 = vpop.f32.mrf.mxu0
        %v1377 = vadd.f32 0.0, %v1376
        %1378 = vmatmul.f32.gmra.mxu0 %v1357
        %v1379 = vpop.f32.mrf.mxu0
        %v1380 = vadd.f32 0.0, %v1379
        %1381 = vdwg.mxu0
        %v1383 = vsel %vm620, %v1377, 0
        %v1386 = vsel %vm620, %v1380, 0
        %1388 = vmatpush.msra.mxu0 0.0
        %1389 = vmatpush.msra.mxu0 0.0
        %1390 = vmatpush.msra.mxu0 0.0
        %1391 = vmatpush.msra.mxu0 0.0
        %1392 = vmatpush.msra.mxu0 0.0
        %1393 = vmatpush.msra.mxu0 0.0
        %1394 = vmatpush.msra.mxu0 0.0
        %1395 = vmatpush.msra.mxu0 0.0
        %1396 = vmatpush.msra.mxu0 0.0
        %1397 = vmatpush.msra.mxu0 0.0
        %1398 = vmatpush.msra.mxu0 0.0
        %1399 = vmatpush.msra.mxu0 0.0
        %1400 = vmatpush.msra.mxu0 %v786
        %1401 = vmatpush.msra.mxu0 %v785
        %1402 = vmatpush.msra.mxu0 %v784
        %1403 = vmatpush.msra.mxu0 %v783
        %1404 = vmatmul.f32.gmra.mxu0 %v1383
        %v1405 = vpop.f32.mrf.mxu0
        %v1406 = vadd.f32 0.0, %v1405
        %1407 = vmatmul.f32.gmra.mxu0 %v1386
        %v1408 = vpop.f32.mrf.mxu0
        %v1409 = vadd.f32 0.0, %v1408
        %1410 = vdwg.mxu0
        %v1411 = vadd.f32 %v1294, %v1406
        %v1412 = vadd.f32 %v1295, %v1409
        %1413 = vrot.lane.b32.xlu0 %v668, 96
        %v1414 = vpop.permute.xlu0 %1413
        %1415 = vrot.lane.b32.xlu0 %v671, 96
        %v1416 = vpop.permute.xlu0 %1415
        %1417 = vrot.lane.b32.xlu0 %v714, 96
        %v1418 = vpop.permute.xlu0 %1417
        %1419 = vrot.lane.b32.xlu0 %v717, 96
        %v1420 = vpop.permute.xlu0 %1419
        %v1421 = vsel %vm620, %v1414, 0
        %v1423 = vsel %vm620, %v1416, 0
        %v1425 = vsel %vm620, %v1418, 0
        %v1427 = vsel %vm620, %v1420, 0
        %1429 = vmatpush.xpose.msra.mxu0 0.0
        %1430 = vmatpush.xpose.msra.mxu0 0.0
        %1431 = vmatpush.xpose.msra.mxu0 0.0
        %1432 = vmatpush.xpose.msra.mxu0 0.0
        %1433 = vmatpush.xpose.msra.mxu0 0.0
        %1434 = vmatpush.xpose.msra.mxu0 0.0
        %1435 = vmatpush.xpose.msra.mxu0 0.0
        %1436 = vmatpush.xpose.msra.mxu0 0.0
        %1437 = vmatpush.xpose.msra.mxu0 0.0
        %1438 = vmatpush.xpose.msra.mxu0 0.0
        %1439 = vmatpush.xpose.msra.mxu0 0.0
        %1440 = vmatpush.xpose.msra.mxu0 0.0
        %1441 = vmatpush.xpose.msra.mxu0 0.0
        %1442 = vmatpush.xpose.msra.mxu0 0.0
        %1443 = vmatpush.xpose.msra.mxu0 %v1427
        %1444 = vmatpush.xpose.msra.mxu0 %v1425
        %1445 = vmatmul.f32.gmra.mxu0 %v1421
        %v1446 = vpop.f32.mrf.mxu0
        %v1447 = vadd.f32 %v765, %v1446
        %1448 = vmatmul.f32.gmra.mxu0 %v1423
        %v1449 = vpop.f32.mrf.mxu0
        %v1450 = vadd.f32 %v766, %v1449
        %1451 = vdwg.mxu0
        %v1452 = vsel %vm834, %v1447, -inf
        %1453 = vmax.xlane.f32.xlu0 %v1452
        %v1454 = vpop.xlane.xlu0 %1453
        %v1455 = vsel %vm834, %v1450, -inf
        %1456 = vmax.xlane.f32.xlu0 %v1455
        %v1457 = vpop.xlane.xlu0 %1456
        %v1458 = vsub.f32 %v1447, %v1454
        %v1459 = vsub.f32 %v1450, %v1457
        %v1460 = vmul.f32 %v1458, 1.442695
        %v1461 = vpow.pop %v1460
        %v1462 = vmul.f32 %v1459, 1.442695
        %v1463 = vpow.pop %v1462
        %v1464 = vsel %vm834, %v1461, 0.0
        %1465 = vadd.xlane.f32.xlu0 %v1464
        %v1466 = vpop.xlane.xlu0 %1465
        %v1467 = vsel %vm834, %v1463, 0.0
        %1468 = vadd.xlane.f32.xlu0 %v1467
        %v1469 = vpop.xlane.xlu0 %1468
        %v1470 = vrcp.pop %v1466
        %v1471 = vrcp.pop %v1469
        %v1472 = vmul.f32 %v1461, %v1470
        %v1473 = vmul.f32 %v1463, %v1471
        %1476 = vrot.lane.b32.xlu0 %v760, 96
        %v1477 = vpop.permute.xlu0 %1476
        %1478 = vrot.lane.b32.xlu0 %v763, 96
        %v1479 = vpop.permute.xlu0 %1478
        %v1483 = vsel %vm834, %v1472, 0
        %v1486 = vsel %vm834, %v1473, 0
        %1488 = vmatpush.msra.mxu0 0.0
        %1489 = vmatpush.msra.mxu0 0.0
        %1490 = vmatpush.msra.mxu0 0.0
        %1491 = vmatpush.msra.mxu0 0.0
        %1492 = vmatpush.msra.mxu0 0.0
        %1493 = vmatpush.msra.mxu0 0.0
        %1494 = vmatpush.msra.mxu0 0.0
        %1495 = vmatpush.msra.mxu0 0.0
        %1496 = vmatpush.msra.mxu0 0.0
        %1497 = vmatpush.msra.mxu0 0.0
        %1498 = vmatpush.msra.mxu0 0.0
        %1499 = vmatpush.msra.mxu0 0.0
        %1500 = vmatpush.msra.mxu0 0.0
        %1501 = vmatpush.msra.mxu0 0.0
        %1502 = vmatpush.msra.mxu0 %v1479
        %1503 = vmatpush.msra.mxu0 %v1477
        %1504 = vmatmul.f32.gmra.mxu0 %v1483
        %v1505 = vpop.f32.mrf.mxu0
        %v1506 = vadd.f32 0.0, %v1505
        %1507 = vmatmul.f32.gmra.mxu0 %v1486
        %v1508 = vpop.f32.mrf.mxu0
        %v1509 = vadd.f32 0.0, %v1508
        %1510 = vdwg.mxu0
        %v1512 = vsel %vm620, %v1506, 0
        %v1515 = vsel %vm620, %v1509, 0
        %1517 = vmatpush.msra.mxu0 0.0
        %1518 = vmatpush.msra.mxu0 0.0
        %1519 = vmatpush.msra.mxu0 0.0
        %1520 = vmatpush.msra.mxu0 0.0
        %1521 = vmatpush.msra.mxu0 0.0
        %1522 = vmatpush.msra.mxu0 0.0
        %1523 = vmatpush.msra.mxu0 0.0
        %1524 = vmatpush.msra.mxu0 0.0
        %1525 = vmatpush.msra.mxu0 0.0
        %1526 = vmatpush.msra.mxu0 0.0
        %1527 = vmatpush.msra.mxu0 0.0
        %1528 = vmatpush.msra.mxu0 0.0
        %1529 = vmatpush.msra.mxu0 %v790
        %1530 = vmatpush.msra.mxu0 %v789
        %1531 = vmatpush.msra.mxu0 %v788
        %1532 = vmatpush.msra.mxu0 %v787
        %1533 = vmatmul.f32.gmra.mxu0 %v1512
        %v1534 = vpop.f32.mrf.mxu0
        %v1535 = vadd.f32 0.0, %v1534
        %1536 = vmatmul.f32.gmra.mxu0 %v1515
        %v1537 = vpop.f32.mrf.mxu0
        %v1538 = vadd.f32 0.0, %v1537
        %1539 = vdwg.mxu0
        %v1540 = vadd.f32 %v1411, %v1535
        %v1541 = vadd.f32 %v1412, %v1538
        %1542 = vrot.lane.b32.xlu0 %v668, 64
        %v1543 = vpop.permute.xlu0 %1542
        %1544 = vrot.lane.b32.xlu0 %v671, 64
        %v1545 = vpop.permute.xlu0 %1544
        %1546 = vrot.lane.b32.xlu0 %v714, 64
        %v1547 = vpop.permute.xlu0 %1546
        %1548 = vrot.lane.b32.xlu0 %v717, 64
        %v1549 = vpop.permute.xlu0 %1548
        %v1550 = vsel %vm620, %v1543, 0
        %v1552 = vsel %vm620, %v1545, 0
        %v1554 = vsel %vm620, %v1547, 0
        %v1556 = vsel %vm620, %v1549, 0
        %1558 = vmatpush.xpose.msra.mxu0 0.0
        %1559 = vmatpush.xpose.msra.mxu0 0.0
        %1560 = vmatpush.xpose.msra.mxu0 0.0
        %1561 = vmatpush.xpose.msra.mxu0 0.0
        %1562 = vmatpush.xpose.msra.mxu0 0.0
        %1563 = vmatpush.xpose.msra.mxu0 0.0
        %1564 = vmatpush.xpose.msra.mxu0 0.0
        %1565 = vmatpush.xpose.msra.mxu0 0.0
        %1566 = vmatpush.xpose.msra.mxu0 0.0
        %1567 = vmatpush.xpose.msra.mxu0 0.0
        %1568 = vmatpush.xpose.msra.mxu0 0.0
        %1569 = vmatpush.xpose.msra.mxu0 0.0
        %1570 = vmatpush.xpose.msra.mxu0 0.0
        %1571 = vmatpush.xpose.msra.mxu0 0.0
        %1572 = vmatpush.xpose.msra.mxu0 %v1556
        %1573 = vmatpush.xpose.msra.mxu0 %v1554
        %1574 = vmatmul.f32.gmra.mxu0 %v1550
        %v1575 = vpop.f32.mrf.mxu0
        %v1576 = vadd.f32 %v765, %v1575
        %1577 = vmatmul.f32.gmra.mxu0 %v1552
        %v1578 = vpop.f32.mrf.mxu0
        %v1579 = vadd.f32 %v766, %v1578
        %1580 = vdwg.mxu0
        %v1581 = vsel %vm834, %v1576, -inf
        %1582 = vmax.xlane.f32.xlu0 %v1581
        %v1583 = vpop.xlane.xlu0 %1582
        %v1584 = vsel %vm834, %v1579, -inf
        %1585 = vmax.xlane.f32.xlu0 %v1584
        %v1586 = vpop.xlane.xlu0 %1585
        %v1587 = vsub.f32 %v1576, %v1583
        %v1588 = vsub.f32 %v1579, %v1586
        %v1589 = vmul.f32 %v1587, 1.442695
        %v1590 = vpow.pop %v1589
        %v1591 = vmul.f32 %v1588, 1.442695
        %v1592 = vpow.pop %v1591
        %v1593 = vsel %vm834, %v1590, 0.0
        %1594 = vadd.xlane.f32.xlu0 %v1593
        %v1595 = vpop.xlane.xlu0 %1594
        %v1596 = vsel %vm834, %v1592, 0.0
        %1597 = vadd.xlane.f32.xlu0 %v1596
        %v1598 = vpop.xlane.xlu0 %1597
        %v1599 = vrcp.pop %v1595
        %v1600 = vrcp.pop %v1598
        %v1601 = vmul.f32 %v1590, %v1599
        %v1602 = vmul.f32 %v1592, %v1600
        %1603 = vrot.lane.b32.xlu0 %v760, 64
        %v1604 = vpop.permute.xlu0 %1603
        %1605 = vrot.lane.b32.xlu0 %v763, 64
        %v1606 = vpop.permute.xlu0 %1605
        %v1610 = vsel %vm834, %v1601, 0
        %v1613 = vsel %vm834, %v1602, 0
        %1615 = vmatpush.msra.mxu0 0.0
        %1616 = vmatpush.msra.mxu0 0.0
        %1617 = vmatpush.msra.mxu0 0.0
        %1618 = vmatpush.msra.mxu0 0.0
        %1619 = vmatpush.msra.mxu0 0.0
        %1620 = vmatpush.msra.mxu0 0.0
        %1621 = vmatpush.msra.mxu0 0.0
        %1622 = vmatpush.msra.mxu0 0.0
        %1623 = vmatpush.msra.mxu0 0.0
        %1624 = vmatpush.msra.mxu0 0.0
        %1625 = vmatpush.msra.mxu0 0.0
        %1626 = vmatpush.msra.mxu0 0.0
        %1627 = vmatpush.msra.mxu0 0.0
        %1628 = vmatpush.msra.mxu0 0.0
        %1629 = vmatpush.msra.mxu0 %v1606
        %1630 = vmatpush.msra.mxu0 %v1604
        %1631 = vmatmul.f32.gmra.mxu0 %v1610
        %v1632 = vpop.f32.mrf.mxu0
        %v1633 = vadd.f32 0.0, %v1632
        %1634 = vmatmul.f32.gmra.mxu0 %v1613
        %v1635 = vpop.f32.mrf.mxu0
        %v1636 = vadd.f32 0.0, %v1635
        %1637 = vdwg.mxu0
        %v1639 = vsel %vm620, %v1633, 0
        %v1642 = vsel %vm620, %v1636, 0
        %1644 = vmatpush.msra.mxu0 0.0
        %1645 = vmatpush.msra.mxu0 0.0
        %1646 = vmatpush.msra.mxu0 0.0
        %1647 = vmatpush.msra.mxu0 0.0
        %1648 = vmatpush.msra.mxu0 0.0
        %1649 = vmatpush.msra.mxu0 0.0
        %1650 = vmatpush.msra.mxu0 0.0
        %1651 = vmatpush.msra.mxu0 0.0
        %1652 = vmatpush.msra.mxu0 0.0
        %1653 = vmatpush.msra.mxu0 0.0
        %1654 = vmatpush.msra.mxu0 0.0
        %1655 = vmatpush.msra.mxu0 0.0
        %1656 = vmatpush.msra.mxu0 %v794
        %1657 = vmatpush.msra.mxu0 %v793
        %1658 = vmatpush.msra.mxu0 %v792
        %1659 = vmatpush.msra.mxu0 %v791
        %1660 = vmatmul.f32.gmra.mxu0 %v1639
        %v1661 = vpop.f32.mrf.mxu0
        %v1662 = vadd.f32 0.0, %v1661
        %1663 = vmatmul.f32.gmra.mxu0 %v1642
        %v1664 = vpop.f32.mrf.mxu0
        %v1665 = vadd.f32 0.0, %v1664
        %1666 = vdwg.mxu0
        %v1667 = vadd.f32 %v1540, %v1662
        %v1668 = vadd.f32 %v1541, %v1665
        %1669 = vrot.lane.b32.xlu0 %v668, 32
        %v1670 = vpop.permute.xlu0 %1669
        %1671 = vrot.lane.b32.xlu0 %v671, 32
        %v1672 = vpop.permute.xlu0 %1671
        %1673 = vrot.lane.b32.xlu0 %v714, 32
        %v1674 = vpop.permute.xlu0 %1673
        %1675 = vrot.lane.b32.xlu0 %v717, 32
        %v1676 = vpop.permute.xlu0 %1675
        %v1677 = vsel %vm620, %v1670, 0
        %v1679 = vsel %vm620, %v1672, 0
        %v1681 = vsel %vm620, %v1674, 0
        %v1683 = vsel %vm620, %v1676, 0
        %1685 = vmatpush.xpose.msra.mxu0 0.0
        %1686 = vmatpush.xpose.msra.mxu0 0.0
        %1687 = vmatpush.xpose.msra.mxu0 0.0
        %1688 = vmatpush.xpose.msra.mxu0 0.0
        %1689 = vmatpush.xpose.msra.mxu0 0.0
        %1690 = vmatpush.xpose.msra.mxu0 0.0
        %1691 = vmatpush.xpose.msra.mxu0 0.0
        %1692 = vmatpush.xpose.msra.mxu0 0.0
        %1693 = vmatpush.xpose.msra.mxu0 0.0
        %1694 = vmatpush.xpose.msra.mxu0 0.0
        %1695 = vmatpush.xpose.msra.mxu0 0.0
        %1696 = vmatpush.xpose.msra.mxu0 0.0
        %1697 = vmatpush.xpose.msra.mxu0 0.0
        %1698 = vmatpush.xpose.msra.mxu0 0.0
        %1699 = vmatpush.xpose.msra.mxu0 %v1683
        %1700 = vmatpush.xpose.msra.mxu0 %v1681
        %1701 = vmatmul.f32.gmra.mxu0 %v1677
        %v1702 = vpop.f32.mrf.mxu0
        %v1703 = vadd.f32 %v765, %v1702
        %1704 = vmatmul.f32.gmra.mxu0 %v1679
        %v1705 = vpop.f32.mrf.mxu0
        %v1706 = vadd.f32 %v766, %v1705
        %1707 = vdwg.mxu0
        %v1708 = vsel %vm834, %v1703, -inf
        %1709 = vmax.xlane.f32.xlu0 %v1708
        %v1710 = vpop.xlane.xlu0 %1709
        %v1711 = vsel %vm834, %v1706, -inf
        %1712 = vmax.xlane.f32.xlu0 %v1711
        %v1713 = vpop.xlane.xlu0 %1712
        %v1714 = vsub.f32 %v1703, %v1710
        %v1715 = vsub.f32 %v1706, %v1713
        %v1716 = vmul.f32 %v1714, 1.442695
        %v1717 = vpow.pop %v1716
        %v1718 = vmul.f32 %v1715, 1.442695
        %v1719 = vpow.pop %v1718
        %v1720 = vsel %vm834, %v1717, 0.0
        %1721 = vadd.xlane.f32.xlu0 %v1720
        %v1722 = vpop.xlane.xlu0 %1721
        %v1723 = vsel %vm834, %v1719, 0.0
        %1724 = vadd.xlane.f32.xlu0 %v1723
        %v1725 = vpop.xlane.xlu0 %1724
        %v1726 = vrcp.pop %v1722
        %v1727 = vrcp.pop %v1725
        %v1728 = vmul.f32 %v1717, %v1726
        %v1729 = vmul.f32 %v1719, %v1727
        %1730 = vrot.lane.b32.xlu0 %v760, 32
        %v1731 = vpop.permute.xlu0 %1730
        %1732 = vrot.lane.b32.xlu0 %v763, 32
        %v1733 = vpop.permute.xlu0 %1732
        %v1737 = vsel %vm834, %v1728, 0
        %v1740 = vsel %vm834, %v1729, 0
        %1742 = vmatpush.msra.mxu0 0.0
        %1743 = vmatpush.msra.mxu0 0.0
        %1744 = vmatpush.msra.mxu0 0.0
        %1745 = vmatpush.msra.mxu0 0.0
        %1746 = vmatpush.msra.mxu0 0.0
        %1747 = vmatpush.msra.mxu0 0.0
        %1748 = vmatpush.msra.mxu0 0.0
        %1749 = vmatpush.msra.mxu0 0.0
        %1750 = vmatpush.msra.mxu0 0.0
        %1751 = vmatpush.msra.mxu0 0.0
        %1752 = vmatpush.msra.mxu0 0.0
        %1753 = vmatpush.msra.mxu0 0.0
        %1754 = vmatpush.msra.mxu0 0.0
        %1755 = vmatpush.msra.mxu0 0.0
        %1756 = vmatpush.msra.mxu0 %v1733
        %1757 = vmatpush.msra.mxu0 %v1731
        %1758 = vmatmul.f32.gmra.mxu0 %v1737
        %v1759 = vpop.f32.mrf.mxu0
        %v1760 = vadd.f32 0.0, %v1759
        %1761 = vmatmul.f32.gmra.mxu0 %v1740
        %v1762 = vpop.f32.mrf.mxu0
        %v1763 = vadd.f32 0.0, %v1762
        %1764 = vdwg.mxu0
        %v1766 = vsel %vm620, %v1760, 0
        %v1769 = vsel %vm620, %v1763, 0
        %1771 = vmatpush.msra.mxu0 0.0
        %1772 = vmatpush.msra.mxu0 0.0
        %1773 = vmatpush.msra.mxu0 0.0
        %1774 = vmatpush.msra.mxu0 0.0
        %1775 = vmatpush.msra.mxu0 0.0
        %1776 = vmatpush.msra.mxu0 0.0
        %1777 = vmatpush.msra.mxu0 0.0
        %1778 = vmatpush.msra.mxu0 0.0
        %1779 = vmatpush.msra.mxu0 0.0
        %1780 = vmatpush.msra.mxu0 0.0
        %1781 = vmatpush.msra.mxu0 0.0
        %1782 = vmatpush.msra.mxu0 0.0
        %1783 = vmatpush.msra.mxu0 %v798
        %1784 = vmatpush.msra.mxu0 %v797
        %1785 = vmatpush.msra.mxu0 %v796
        %1786 = vmatpush.msra.mxu0 %v795
        %1787 = vmatmul.f32.gmra.mxu0 %v1766
        %v1788 = vpop.f32.mrf.mxu0
        %v1789 = vadd.f32 0.0, %v1788
        %1790 = vmatmul.f32.gmra.mxu0 %v1769
        %v1791 = vpop.f32.mrf.mxu0
        %v1792 = vadd.f32 0.0, %v1791
        %1793 = vdwg.mxu0
        %v1794 = vadd.f32 %v1667, %v1789
        %v1795 = vadd.f32 %v1668, %v1792
        %v1796 = vld [vmem:[%s556] sm:$0x1]
        %v1798 = vperm.slane %v1796, 0
        %v1800 = vadd.f32 %v1794, %v1798
        %v1801 = vadd.f32 %v1795, %v1798
        %v1802 = vadd.f32 %v1800, %v594
        %v1803 = vadd.f32 %v1801, %v595
        %v1804 = vsel %vm620, %v1802, 0.0
        %1805 = vadd.xlane.f32.xlu0 %v1804
        %v1806 = vpop.xlane.xlu0 %1805
        %v1807 = vsel %vm620, %v1803, 0.0
        %1808 = vadd.xlane.f32.xlu0 %v1807
        %v1809 = vpop.xlane.xlu0 %1808
        %v1810 = vrcp.pop 32.0
        %v1811 = vmul.f32 32.0, %v1810
        %v1812 = vsub.f32 1.0, %v1811
        %v1813 = vmul.f32 %v1810, %v1812
        %v1814 = vadd.f32 %v1810, %v1813
        %vm1815 = vweird.f32 %v1810
        %v1816 = vsel %vm1815, %v1810, %v1814
        %v1817 = vmul.f32 %v1806, %v1816
        %v1818 = vmul.f32 %v1809, %v1816
        %v1819 = vsub.f32 %v1802, %v1817
        %v1820 = vsub.f32 %v1803, %v1818
        %v1821 = vmul.f32 %v1819, %v1819
        %v1822 = vmul.f32 %v1820, %v1820
        %v1823 = vsel %vm620, %v1821, 0.0
        %1824 = vadd.xlane.f32.xlu0 %v1823
        %v1825 = vpop.xlane.xlu0 %1824
        %v1826 = vsel %vm620, %v1822, 0.0
        %1827 = vadd.xlane.f32.xlu0 %v1826
        %v1828 = vpop.xlane.xlu0 %1827
        %v1829 = vmul.f32 %v1825, %v1816
        %v1830 = vmul.f32 %v1828, %v1816
        %v1831 = vadd.f32 %v1829, 1e-05
        %v1832 = vadd.f32 %v1830, 1e-05
        %v1833 = vrsqrt.pop %v1831
        %v1834 = vmul.f32 %v1833, %v1831
        %v1835 = vmul.f32 %v1834, %v1833
        %v1836 = vmul.f32 0.5, %v1835
        %v1837 = vsub.f32 1.5, %v1836
        %v1838 = vmul.f32 %v1833, %v1837
        %vm1839 = vweird.f32 %v1831
        %vm1840 = vweird.f32 %v1833
        %vm1841 = vmor %vm1839, %vm1840
        %v1842 = vsel %vm1841, %v1833, %v1838
        %v1843 = vrsqrt.pop %v1832
        %v1844 = vmul.f32 %v1843, %v1832
        %v1845 = vmul.f32 %v1844, %v1843
        %v1846 = vmul.f32 0.5, %v1845
        %v1847 = vsub.f32 1.5, %v1846
        %v1848 = vmul.f32 %v1843, %v1847
        %vm1849 = vweird.f32 %v1832
        %vm1850 = vweird.f32 %v1843
        %vm1851 = vmor %vm1849, %vm1850
        %v1852 = vsel %vm1851, %v1843, %v1848
        %v1853 = vmul.f32 %v1819, %v1842
        %v1854 = vmul.f32 %v1820, %v1852
        %v1855 = vld [vmem:[%s559] sm:$0x1]
        %v1857 = vperm.slane %v1855, 0
        %v1859 = vmul.f32 %v1853, %v1857
        %v1860 = vmul.f32 %v1854, %v1857
        %v1861 = vld [vmem:[%s562] sm:$0x1]
        %v1863 = vperm.slane %v1861, 0
        %v1865 = vadd.f32 %v1859, %v1863
        %v1866 = vadd.f32 %v1860, %v1863
        %v1867 = vld [vmem:[%s567] sm:$0xff]
        %v1868 = vld [vmem:[%s567 + $0x8] sm:$0xff]
        %v1869 = vld [vmem:[%s567 + $0x10] sm:$0xff]
        %v1870 = vld [vmem:[%s567 + $0x18] sm:$0xff]
        %v1871 = vld [vmem:[%s570] sm:$0x1]
        %v1873 = vperm.slane %v1871, 0
        %v1876 = vsel %vm620, %v1865, 0
        %v1879 = vsel %vm620, %v1866, 0
        %1881 = vmatpush.msra.mxu0 0.0
        %1882 = vmatpush.msra.mxu0 0.0
        %1883 = vmatpush.msra.mxu0 0.0
        %1884 = vmatpush.msra.mxu0 0.0
        %1885 = vmatpush.msra.mxu0 0.0
        %1886 = vmatpush.msra.mxu0 0.0
        %1887 = vmatpush.msra.mxu0 0.0
        %1888 = vmatpush.msra.mxu0 0.0
        %1889 = vmatpush.msra.mxu0 0.0
        %1890 = vmatpush.msra.mxu0 0.0
        %1891 = vmatpush.msra.mxu0 0.0
        %1892 = vmatpush.msra.mxu0 0.0
        %1893 = vmatpush.msra.mxu0 %v1870
        %1894 = vmatpush.msra.mxu0 %v1869
        %1895 = vmatpush.msra.mxu0 %v1868
        %1896 = vmatpush.msra.mxu0 %v1867
        %1897 = vmatmul.f32.gmra.mxu0 %v1876
        %v1898 = vpop.f32.mrf.mxu0
        %v1899 = vadd.f32 %v1873, %v1898
        %1900 = vmatmul.f32.gmra.mxu0 %v1879
        %v1901 = vpop.f32.mrf.mxu0
        %v1902 = vadd.f32 %v1873, %v1901
        %1903 = vdwg.mxu0
        %v1904 = vmax.f32 %v1899, 0.0
        %v1905 = vmax.f32 %v1902, 0.0
        %v1906 = vld [vmem:[%s575] sm:$0xff]
        %v1907 = vld [vmem:[%s575 + $0x8] sm:$0xff]
        %v1908 = vld [vmem:[%s575 + $0x10] sm:$0xff]
        %v1909 = vld [vmem:[%s575 + $0x18] sm:$0xff]
        %v1910 = vld [vmem:[%s575 + $0x20] sm:$0xff]
        %v1911 = vld [vmem:[%s575 + $0x28] sm:$0xff]
        %v1912 = vld [vmem:[%s575 + $0x30] sm:$0xff]
        %v1913 = vld [vmem:[%s575 + $0x38] sm:$0xff]
        %v1914 = vld [vmem:[%s575 + $0x40] sm:$0xff]
        %v1915 = vld [vmem:[%s575 + $0x48] sm:$0xff]
        %v1916 = vld [vmem:[%s575 + $0x50] sm:$0xff]
        %v1917 = vld [vmem:[%s575 + $0x58] sm:$0xff]
        %v1918 = vld [vmem:[%s575 + $0x60] sm:$0xff]
        %v1919 = vld [vmem:[%s575 + $0x68] sm:$0xff]
        %v1920 = vld [vmem:[%s575 + $0x70] sm:$0xff]
        %v1921 = vld [vmem:[%s575 + $0x78] sm:$0xff]
        %v1922 = vld [vmem:[%s578] sm:$0x1]
        %v1924 = vperm.slane %v1922, 0
        %1926 = vmatpush.msra.mxu0 %v1921
        %1927 = vmatpush.msra.mxu0 %v1920
        %1928 = vmatpush.msra.mxu0 %v1919
        %1929 = vmatpush.msra.mxu0 %v1918
        %1930 = vmatpush.msra.mxu0 %v1917
        %1931 = vmatpush.msra.mxu0 %v1916
        %1932 = vmatpush.msra.mxu0 %v1915
        %1933 = vmatpush.msra.mxu0 %v1914
        %1934 = vmatpush.msra.mxu0 %v1913
        %1935 = vmatpush.msra.mxu0 %v1912
        %1936 = vmatpush.msra.mxu0 %v1911
        %1937 = vmatpush.msra.mxu0 %v1910
        %1938 = vmatpush.msra.mxu0 %v1909
        %1939 = vmatpush.msra.mxu0 %v1908
        %1940 = vmatpush.msra.mxu0 %v1907
        %1941 = vmatpush.msra.mxu0 %v1906
        %1942 = vmatmul.f32.gmra.mxu0 %v1904
        %v1943 = vpop.f32.mrf.mxu0
        %v1944 = vadd.f32 %v1924, %v1943
        %1945 = vmatmul.f32.gmra.mxu0 %v1905
        %v1946 = vpop.f32.mrf.mxu0
        %v1947 = vadd.f32 %v1924, %v1946
        %1948 = vdwg.mxu0
        %v1949 = vadd.f32 %v1944, %v1865
        %v1950 = vadd.f32 %v1947, %v1866
        %v1951 = vsel %vm620, %v1949, 0.0
        %1952 = vadd.xlane.f32.xlu0 %v1951
        %v1953 = vpop.xlane.xlu0 %1952
        %v1954 = vsel %vm620, %v1950, 0.0
        %1955 = vadd.xlane.f32.xlu0 %v1954
        %v1956 = vpop.xlane.xlu0 %1955
        %v1957 = vmul.f32 %v1953, %v1816
        %v1958 = vmul.f32 %v1956, %v1816
        %v1959 = vsub.f32 %v1949, %v1957
        %v1960 = vsub.f32 %v1950, %v1958
        %v1961 = vmul.f32 %v1959, %v1959
        %v1962 = vmul.f32 %v1960, %v1960
        %v1963 = vsel %vm620, %v1961, 0.0
        %1964 = vadd.xlane.f32.xlu0 %v1963
        %v1965 = vpop.xlane.xlu0 %1964
        %v1966 = vsel %vm620, %v1962, 0.0
        %1967 = vadd.xlane.f32.xlu0 %v1966
        %v1968 = vpop.xlane.xlu0 %1967
        %v1969 = vmul.f32 %v1965, %v1816
        %v1970 = vmul.f32 %v1968, %v1816
        %v1971 = vadd.f32 %v1969, 1e-05
        %v1972 = vadd.f32 %v1970, 1e-05
        %v1973 = vrsqrt.pop %v1971
        %v1974 = vmul.f32 %v1973, %v1971
        %v1975 = vmul.f32 %v1974, %v1973
        %v1976 = vmul.f32 0.5, %v1975
        %v1977 = vsub.f32 1.5, %v1976
        %v1978 = vmul.f32 %v1973, %v1977
        %vm1979 = vweird.f32 %v1971
        %vm1980 = vweird.f32 %v1973
        %vm1981 = vmor %vm1979, %vm1980
        %v1982 = vsel %vm1981, %v1973, %v1978
        %v1983 = vrsqrt.pop %v1972
        %v1984 = vmul.f32 %v1983, %v1972
        %v1985 = vmul.f32 %v1984, %v1983
        %v1986 = vmul.f32 0.5, %v1985
        %v1987 = vsub.f32 1.5, %v1986
        %v1988 = vmul.f32 %v1983, %v1987
        %vm1989 = vweird.f32 %v1972
        %vm1990 = vweird.f32 %v1983
        %vm1991 = vmor %vm1989, %vm1990
        %v1992 = vsel %vm1991, %v1983, %v1988
        %v1993 = vmul.f32 %v1959, %v1982
        %v1994 = vmul.f32 %v1960, %v1992
        %v1995 = vld [vmem:[%s581] sm:$0x1]
        %v1997 = vperm.slane %v1995, 0
        %v1999 = vmul.f32 %v1993, %v1997
        %v2000 = vmul.f32 %v1994, %v1997
        %v2001 = vld [vmem:[%s584] sm:$0x1]
        %v2003 = vperm.slane %v2001, 0
        %v2005 = vadd.f32 %v1999, %v2003
        %v2006 = vadd.f32 %v2000, %v2003
        %2007 = vst.msk [vmem:[#allocation2] sm:$0xff] %vm620, %v2005
        %2008 = vst.msk [vmem:[#allocation2 + $0x8] sm:$0xff] %vm620, %v2006
        %p2009 = scmp.eq.s32.totalorder %s25, 1
        // Predicated region
        $region77: #{tpu_custom_call.1} parent=71 // pred_check
          %p2010 = pneg %p2009
        $region78: #{tpu_custom_call.1} parent=71 // pred_check_branch
          %2012 = sbr.rel (%p2010) target = $region80
        $region79: #{tpu_custom_call.1} parent=71 // pred_region
          %2013 = vst.msk [vmem:[#allocation3] sm:$0xff] %vm620, %v2005
          %2014 = vst.msk [vmem:[#allocation3 + $0x8] sm:$0xff] %vm620, %v2006
        $region80: #{tpu_custom_call.1} parent=71 // pred_fallthru
          _
        // Predicated region
        $region81: #{tpu_custom_call.1} parent=71 // pred_check
          %p2015 = pneg %p366
        $region82: #{tpu_custom_call.1} parent=71 // pred_check_branch
          %2017 = sbr.rel (%p2015) target = $region84
        $region83: #{tpu_custom_call.1} parent=71 // pred_region
          %2019 = vsyncadd [#allocation4], 0
          %s2020 = sshll.u32 [#allocation3], 4
          %s2021 = int_to_ptr.vmem [resolvable:$true] %s2020
          %s2022 = sshll.u32 %s13, 4
          %s2023 = int_to_ptr.hbm [resolvable:$true] %s2022
          %2028 = dma.vmem_to_hbm [thread:$0]  %s2021, 256, %s2023, [#allocation4], 128, 128, 8
        $region84: #{tpu_custom_call.1} parent=71 // pred_fallthru
          _
        // Predicated region
        $region85: #{tpu_custom_call.1} parent=71 // pred_check
          %p2029 = pneg %p366
        $region86: #{tpu_custom_call.1} parent=71 // pred_check_branch
          %2031 = sbr.rel (%p2029) target = $region88
        $region87: #{tpu_custom_call.1} parent=71 // pred_region
          %2033 = dma.done [#allocation4], 256
        $region88: #{tpu_custom_call.1} parent=71 // pred_fallthru
          _
      $region72: #{tpu_custom_call.1} parent=5 // pred_fallthru
        _
      %p2034 = scmp.le.s32.totalorder 2, %s20
      // Predicated region
      $region89: #{tpu_custom_call.1} parent=5 // pred_check
        %p2035 = pneg %p2034
      $region90: #{tpu_custom_call.1} parent=5 // pred_check_branch
        %2037 = sbr.rel (%p2035) target = $region92
      $region91: #{tpu_custom_call.1} parent=5 // pred_region
        %s2038 = ssub.s32 %s20, 2
      $region92: #{tpu_custom_call.1} parent=5 // pred_fallthru
        _
    $region6: #{tpu_custom_call.1} parent=1 // loop_footer
      %s24 = sadd.s32 1, %s20
    $region7: #{tpu_custom_call.1} parent=1 // loop_footer_branch
      %19 = sbr.rel target = $region3
    $region8: #{tpu_custom_call.1} parent=1 // loop_exit
      _
    %2039 = vsyncpa [#allocation4], 1
    %s2040 = scalar_lea.sflag [#allocation4], 1
    %2041 = vsyncpa %s2040, 1

</llo_original>
